<compile_context>
chip_gen: v7x
topology: tpu7x:2x2x1
jax: 0.10.0
libtpu: 0.0.40
codegen_flags: <defaults>
</compile_context>

<pallas_src>
import jax
import jax.numpy as jnp
from jax.experimental import pallas as pl
from jax.experimental.pallas import tpu as pltpu

IN_FEATURES = 4
H1 = 8
H2 = 9
OUT_FEATURES = 3

LANE = 128      # lane-padded width of every feature dim inside the kernel
OUT_PAD = 8     # HBM output width (>= OUT_FEATURES; equals full last dim)
MAX_TB = 4096   # max batch-tile rows (~8 MiB VMEM incl. double buffers)

# ---- packed parameter slab layout: (160, 128) f32, zero-padded --------------
# W2's 128-row window is rows [16:144); W3's is rows [32:160).  Rows of each
# window beyond H1 / H2 only multiply a1 / a2 lanes that are exactly zero, so
# the windows (and the b2/b3 rows inside W3's window) may alias safely.
W1_ROW = 0           # rows [0:4)    real W1 (4 x 8)
B1_ROW = 8           # row   8       real b1 (8)
W2_ROW = 16          # window [16:144); real W2 in rows [16:24),  cols [0:9)
W3_ROW = 32          # window [32:160); real W3 in rows [32:41),  cols [0:3)
B2_ROW = 144         # row 144: outside W2 window; zero-lane row of W3 window
B3_ROW = 152         # row 152: zero-lane row of W3 window
SLAB_ROWS = 160      # 80 KiB resident in VMEM


def _cdiv(a, b):
    return -(-a // b)


def _round_up(a, m):
    return _cdiv(a, m) * m


def mlp_kernel(x_ref, p_ref, o_ref):
    # x_ref: (TB, IN_FEATURES); p_ref: (SLAB_ROWS, 128) packed params;
    # o_ref: (TB, OUT_PAD) narrow output (cols >= OUT_FEATURES are zero).
    x = x_ref[...]
    hi = jax.lax.Precision.HIGHEST

    w1 = p_ref[W1_ROW:W1_ROW + IN_FEATURES, :]          # (4, 128)
    b1 = p_ref[B1_ROW:B1_ROW + 1, :]                    # (1, 128)
    a1 = jnp.dot(x, w1, preferred_element_type=jnp.float32, precision=hi) + b1
    a1 = jnp.maximum(a1, 0.0)                           # pad lanes stay 0

    w2 = p_ref[W2_ROW:W2_ROW + LANE, :]                 # (128, 128)
    b2 = p_ref[B2_ROW:B2_ROW + 1, :]
    a2 = jnp.dot(a1, w2, preferred_element_type=jnp.float32, precision=hi) + b2
    a2 = jnp.maximum(a2, 0.0)                           # pad lanes stay 0

    w3 = p_ref[W3_ROW:W3_ROW + LANE, :]                 # (128, 128)
    b3 = p_ref[B3_ROW:B3_ROW + 1, :]
    a3 = jnp.dot(a2, w3, preferred_element_type=jnp.float32, precision=hi) + b3

    # Narrow writeback: only OUT_PAD columns leave the chip.
    o_ref[...] = a3[:, :OUT_PAD].astype(o_ref.dtype)


def mlp_forward(x, packed):
    B = x.shape[0]
    # >= 2 tiles whenever B > 8 so v7x's two TensorCores both get work;
    # cap each tile at MAX_TB rows to bound VMEM (and minimize pad rows).
    n_target = 1 if B <= 8 else max(2, _cdiv(B, MAX_TB))
    TB = max(8, _round_up(_cdiv(B, n_target), 8))
    n_tiles = _cdiv(B, TB)
    B_pad = n_tiles * TB
    if B_pad != B:
        x = jnp.pad(x, ((0, B_pad - B), (0, 0)))

    flops = 2 * B_pad * (IN_FEATURES * H1 + H1 * H2 + H2 * OUT_FEATURES)
    bytes_accessed = 4 * (B_pad * IN_FEATURES + SLAB_ROWS * LANE
                          + B_pad * OUT_PAD)

    out = pl.pallas_call(
        mlp_kernel,
        out_shape=jax.ShapeDtypeStruct((B_pad, OUT_PAD), jnp.float32),
        grid=(n_tiles,),
        in_specs=[
            # Batch tile of activations (auto double-buffered).
            pl.BlockSpec((TB, IN_FEATURES), lambda i: (i, 0)),
            # Packed parameter slab: constant block index -> fetched once and
            # resident in VMEM; single-buffered (a 2nd copy would be waste).
            pl.BlockSpec((SLAB_ROWS, LANE), lambda i: (0, 0),
                         pipeline_mode=pl.Buffered(1)),
        ],
        out_specs=pl.BlockSpec((TB, OUT_PAD), lambda i: (i, 0)),
        compiler_params=pltpu.CompilerParams(
            dimension_semantics=("parallel",)),
        cost_estimate=pl.CostEstimate(
            flops=flops, transcendentals=0, bytes_accessed=bytes_accessed),
    )(x, packed)

    return out[:B, :OUT_FEATURES]


def init_params(key):
    # nn.Linear-style uniform init; weights stored transposed (in_dim, out_dim).
    k1, k2, k3, k4, k5, k6 = jax.random.split(key, 6)

    def uniform_init(k, shape, fan_in):
        bound = 1.0 / jnp.sqrt(fan_in)
        return jax.random.uniform(k, shape, jnp.float32, -bound, bound)

    w1 = uniform_init(k1, (IN_FEATURES, H1), IN_FEATURES)
    b1 = uniform_init(k2, (H1,), IN_FEATURES)
    w2 = uniform_init(k3, (H1, H2), H1)
    b2 = uniform_init(k4, (H2,), H1)
    w3 = uniform_init(k5, (H2, OUT_FEATURES), H2)
    b3 = uniform_init(k6, (OUT_FEATURES,), H2)
    return (w1, b1, w2, b2, w3, b3)


def pack_params(raw):
    # Zero-padded (SLAB_ROWS, 128) slab; see layout comment above.
    w1, b1, w2, b2, w3, b3 = raw
    slab = jnp.zeros((SLAB_ROWS, LANE), jnp.float32)
    slab = slab.at[W1_ROW:W1_ROW + IN_FEATURES, :H1].set(w1)
    slab = slab.at[B1_ROW, :H1].set(b1)
    slab = slab.at[W2_ROW:W2_ROW + H1, :H2].set(w2)
    slab = slab.at[B2_ROW, :H2].set(b2)
    slab = slab.at[W3_ROW:W3_ROW + H2, :OUT_FEATURES].set(w3)
    slab = slab.at[B3_ROW, :OUT_FEATURES].set(b3)
    return slab


def mlp_reference(x, raw):
    w1, b1, w2, b2, w3, b3 = raw
    a1 = jnp.maximum(x @ w1 + b1, 0.0)
    a2 = jnp.maximum(a1 @ w2 + b2, 0.0)
    return a2 @ w3 + b3


if __name__ == "__main__":
    key = jax.random.PRNGKey(0)
    kx, kp = jax.random.split(key)

    raw_params = init_params(kp)
    packed = pack_params(raw_params)

    # B=8: single tile; B=13: exercises batch padding + the 2-tile path.
    for B in (8, 13):
        xb = jax.random.normal(jax.random.fold_in(kx, B),
                               (B, IN_FEATURES), jnp.float32)
        out = jax.block_until_ready(mlp_forward(xb, packed))
        ref = mlp_reference(xb, raw_params)
        assert out.shape == (B, OUT_FEATURES)
        assert jnp.allclose(out, ref, atol=1e-4, rtol=1e-4), (
            f"mismatch at B={B}: max abs err "
            f"{float(jnp.max(jnp.abs(out - ref)))}")

    print("KERNEL_OK")
</pallas_src>

<mosaic_0001>
module attributes {stable_mosaic.version = 11 : i64} {
  func.func @mlp_kernel(%arg0: i32, %arg1: memref<8x4xf32, #tpu.memory_space<vmem>>, %arg2: memref<160x128xf32, #tpu.memory_space<vmem>>, %arg3: memref<8x8xf32, #tpu.memory_space<vmem>>) attributes {dimension_semantics = [#tpu.dimension_semantics<parallel>], iteration_bounds = array<i64: 1>, scalar_prefetch = 0 : i64, scratch_operands = 0 : i64, tpu.core_type = #tpu.core_type<tc>, window_params = [{transform_indices = @transform_0, window_bounds = array<i64: 8, 4>}, {pipeline_mode = #tpu.pipeline_mode<synchronous>, transform_indices = @transform_1, window_bounds = array<i64: 160, 128>}, {transform_indices = @transform_2, window_bounds = array<i64: 8, 8>}]} {
    %c0 = arith.constant 0 : index
    %c0_0 = arith.constant 0 : index
    %0 = vector.load %arg1[%c0, %c0_0] : memref<8x4xf32, #tpu.memory_space<vmem>>, vector<8x4xf32>
    %c0_1 = arith.constant 0 : index
    %c0_2 = arith.constant 0 : index
    %1 = vector.load %arg2[%c0_1, %c0_2] : memref<160x128xf32, #tpu.memory_space<vmem>>, vector<4x128xf32>
    %c8 = arith.constant 8 : index
    %c0_3 = arith.constant 0 : index
    %2 = vector.load %arg2[%c8, %c0_3] : memref<160x128xf32, #tpu.memory_space<vmem>>, vector<1x128xf32>
    %cst = arith.constant dense<0.000000e+00> : vector<8x128xf32>
    %3 = tpu.matmul %0, %1, %cst {dimension_numbers = #tpu.dot_dimension_numbers<[1], [0], [0], [1], [0, 0, 1, 1], [], []>, precision = #tpu.contract_precision<fp32>} : vector<8x4xf32>, vector<4x128xf32>, vector<8x128xf32> -> vector<8x128xf32>
    %4 = vector.broadcast %2 : vector<1x128xf32> to vector<8x128xf32>
    %5 = arith.addf %3, %4 : vector<8x128xf32>
    %cst_4 = arith.constant 0.000000e+00 : f32
    %6 = vector.broadcast %cst_4 : f32 to vector<8x128xf32>
    %7 = arith.maximumf %5, %6 : vector<8x128xf32>
    %c16 = arith.constant 16 : index
    %c0_5 = arith.constant 0 : index
    %8 = vector.load %arg2[%c16, %c0_5] : memref<160x128xf32, #tpu.memory_space<vmem>>, vector<128x128xf32>
    %c144 = arith.constant 144 : index
    %c0_6 = arith.constant 0 : index
    %9 = vector.load %arg2[%c144, %c0_6] : memref<160x128xf32, #tpu.memory_space<vmem>>, vector<1x128xf32>
    %cst_7 = arith.constant dense<0.000000e+00> : vector<8x128xf32>
    %10 = tpu.matmul %7, %8, %cst_7 {dimension_numbers = #tpu.dot_dimension_numbers<[1], [0], [0], [1], [0, 0, 1, 1], [], []>, precision = #tpu.contract_precision<fp32>} : vector<8x128xf32>, vector<128x128xf32>, vector<8x128xf32> -> vector<8x128xf32>
    %11 = vector.broadcast %9 : vector<1x128xf32> to vector<8x128xf32>
    %12 = arith.addf %10, %11 : vector<8x128xf32>
    %cst_8 = arith.constant 0.000000e+00 : f32
    %13 = vector.broadcast %cst_8 : f32 to vector<8x128xf32>
    %14 = arith.maximumf %12, %13 : vector<8x128xf32>
    %c32 = arith.constant 32 : index
    %c0_9 = arith.constant 0 : index
    %15 = vector.load %arg2[%c32, %c0_9] : memref<160x128xf32, #tpu.memory_space<vmem>>, vector<128x128xf32>
    %c152 = arith.constant 152 : index
    %c0_10 = arith.constant 0 : index
    %16 = vector.load %arg2[%c152, %c0_10] : memref<160x128xf32, #tpu.memory_space<vmem>>, vector<1x128xf32>
    %cst_11 = arith.constant dense<0.000000e+00> : vector<8x128xf32>
    %17 = tpu.matmul %14, %15, %cst_11 {dimension_numbers = #tpu.dot_dimension_numbers<[1], [0], [0], [1], [0, 0, 1, 1], [], []>, precision = #tpu.contract_precision<fp32>} : vector<8x128xf32>, vector<128x128xf32>, vector<8x128xf32> -> vector<8x128xf32>
    %18 = vector.broadcast %16 : vector<1x128xf32> to vector<8x128xf32>
    %19 = arith.addf %17, %18 : vector<8x128xf32>
    %20 = vector.extract_strided_slice %19 {offsets = [0, 0], sizes = [8, 8], strides = [1, 1]} : vector<8x128xf32> to vector<8x8xf32>
    %c0_12 = arith.constant 0 : index
    %c0_13 = arith.constant 0 : index
    %21 = vector.load %arg3[%c0_12, %c0_13] : memref<8x8xf32, #tpu.memory_space<vmem>>, vector<8x8xf32>
    tpu.vector_store %arg3[%c0_12, %c0_13], %20 {strides = array<i32>} : memref<8x8xf32, #tpu.memory_space<vmem>>, vector<8x8xf32>,
    return
  }
  func.func @transform_0(%arg0: i32) -> (i32, i32) {
    %c0_i32 = arith.constant 0 : i32
    %c0_i32_0 = arith.constant 0 : i32
    return %arg0, %c0_i32 : i32, i32
  }
  func.func @transform_1(%arg0: i32) -> (i32, i32) {
    %c0_i32 = arith.constant 0 : i32
    %c0_i32_0 = arith.constant 0 : i32
    %c0_i32_1 = arith.constant 0 : i32
    return %c0_i32, %c0_i32_0 : i32, i32
  }
  func.func @transform_2(%arg0: i32) -> (i32, i32) {
    %c0_i32 = arith.constant 0 : i32
    %c0_i32_0 = arith.constant 0 : i32
    return %arg0, %c0_i32 : i32, i32
  }
}

</mosaic_0001>

<llo_original>
// kernel: tpu_custom_call.1
$region0: #{tpu_custom_call.1}
  #allocation0 [shape = 'u32[]', space=smem, size = 0x4, offset = 0x4, fixed_abs, tag = 'smem constant byte address 0x4 - core index']
  #allocation1 [shape = 'u32[144,128]{1,0:T(1,128)}', space=vmem, size = 0x12000, scoped, tag = 'internal scratch']
  %s0 = inlined_call_operand.vmem [shape: f32[8,4], index: 0, kind: input, shape index: {}]
  %s1 = inlined_call_operand.hbm [shape: f32[160,128], index: 1, kind: input, shape index: {}]
  %s2 = inlined_call_operand.hbm [shape: f32[8,8], index: 2, kind: output, shape index: {}]
  %s3 = sld [smem:[#allocation0]]
  $region22: #{tpu_custom_call.1} parent=0
    _
  %s5 = ssub.s32 1, %s3
  %s6 = scalar_select 0, %s5, %s3
  $region1: #{tpu_custom_call.1} parent=0
    #allocation2 [shape = 'u8[81920]{0}', space=vmem, size = 0x14000, scoped, tag = 'input window, operand 1, single buffered']
    #allocation3 [shape = 's32[1]{0}', space=sflag, size = 0x4, scoped, tag = 'scoped memory for tpu_custom_call.1']
    #allocation4 [shape = 's32[1]{0}', space=sflag, size = 0x4, scoped, tag = 'scoped memory for tpu_custom_call.1']
    #allocation5 [shape = 'u8[4096]{0}', space=vmem, size = 0x1000, scoped, tag = 'output window, operand 0, single buffered']
    %7 = vsyncpa [#allocation3], 0
    %8 = vsyncpa [#allocation4], 0
    // Predicated region
    $region2: #{tpu_custom_call.1} parent=1 // pred_check
      _
    $region3: #{tpu_custom_call.1} parent=1 // pred_check_branch
      %10 = sbr.rel (0) target = $region5
    $region4: #{tpu_custom_call.1} parent=1 // pred_region
      _
    $region5: #{tpu_custom_call.1} parent=1 // pred_fallthru
      _
    // Predicated region
    $region6: #{tpu_custom_call.1} parent=1 // pred_check
      _
    $region7: #{tpu_custom_call.1} parent=1 // pred_check_branch
      %12 = sbr.rel (0) target = $region9
    $region8: #{tpu_custom_call.1} parent=1 // pred_region
      %s14 = ssub.s32 2560, 2560
      %15 = vsyncadd [#allocation3], %s14
      %s16 = sshll.u32 [#allocation2], 4
      %s17 = int_to_ptr.vmem [resolvable:$true] %s16
      %22 = dma.hbm_to_vmem [thread:$0]  %s1, 2560, %s17, [#allocation3], 128, 128, 8
    $region9: #{tpu_custom_call.1} parent=1 // pred_fallthru
      _
    // Predicated region
    $region10: #{tpu_custom_call.1} parent=1 // pred_check
      _
    $region11: #{tpu_custom_call.1} parent=1 // pred_check_branch
      %24 = sbr.rel (0) target = $region13
    $region12: #{tpu_custom_call.1} parent=1 // pred_region
      %25 = dma.done [#allocation3], 2560
    $region13: #{tpu_custom_call.1} parent=1 // pred_fallthru
      _
    %v26 = vld [vmem:[%s0] sm:$0xff]
    %v27 = vld [vmem:[#allocation2] sm:$0xf]
    %v28 = vld [vmem:[#allocation2 + $0x8] sm:$0x1]
    %v29 = vlaneseq
    %v30 = vshrl.u32 %v29, 7
    %v31 = vsub.s32 0, %v30
    %v32 = vrot.slane %v28, %v31
    %vm33 = vcmask 31744
    %v35 = vsel %vm33, %v26, 0
    %vm37 = vcmask 1043456
    %v39 = vsel %vm37, %v27, 0
    %41 = vmatprep.subr.mxu0 0.0
    %v42 = vand.u32 %v39, 4294901760
    %43 = vmatpush1.msra.mxu0 %v42
    %44 = vmatprep.subr.mxu0 0.0
    %45 = vmatpush1.msra.mxu0 0.0
    %46 = vmatprep.subr.mxu0 0.0
    %47 = vmatpush1.msra.mxu0 0.0
    %48 = vmatprep.subr.mxu0 0.0
    %49 = vmatpush1.msra.mxu0 0.0
    %50 = vmatprep.subr.mxu0 0.0
    %51 = vmatpush1.msra.mxu0 0.0
    %52 = vmatprep.subr.mxu0 0.0
    %53 = vmatpush1.msra.mxu0 0.0
    %54 = vmatprep.subr.mxu0 0.0
    %55 = vmatpush1.msra.mxu0 0.0
    %56 = vmatprep.subr.mxu0 0.0
    %57 = vmatpush1.msra.mxu0 0.0
    %58 = vmatprep.subr.mxu0 0.0
    %59 = vmatpush1.msra.mxu0 0.0
    %60 = vmatprep.subr.mxu0 0.0
    %61 = vmatpush1.msra.mxu0 0.0
    %62 = vmatprep.subr.mxu0 0.0
    %63 = vmatpush1.msra.mxu0 0.0
    %64 = vmatprep.subr.mxu0 0.0
    %65 = vmatpush1.msra.mxu0 0.0
    %66 = vmatprep.subr.mxu0 0.0
    %67 = vmatpush1.msra.mxu0 0.0
    %68 = vmatprep.subr.mxu0 0.0
    %69 = vmatpush1.msra.mxu0 0.0
    %70 = vmatprep.subr.mxu0 0.0
    %71 = vmatpush1.msra.mxu0 0.0
    %72 = vmatprep.subr.mxu0 0.0
    %73 = vmatpush1.msra.mxu0 0.0
    %74 = vmatprep.subr.mxu0 0.0
    %75 = vmatpush1.msra.mxu0 0.0
    %76 = vmatprep.subr.mxu0 0.0
    %77 = vmatpush1.msra.mxu0 0.0
    %78 = vmatprep.subr.mxu0 0.0
    %79 = vmatpush1.msra.mxu0 0.0
    %80 = vmatprep.subr.mxu0 0.0
    %81 = vmatpush1.msra.mxu0 0.0
    %82 = vmatprep.subr.mxu0 0.0
    %83 = vmatpush1.msra.mxu0 0.0
    %84 = vmatprep.subr.mxu0 0.0
    %85 = vmatpush1.msra.mxu0 0.0
    %86 = vmatprep.subr.mxu0 0.0
    %87 = vmatpush1.msra.mxu0 0.0
    %88 = vmatprep.subr.mxu0 0.0
    %89 = vmatpush1.msra.mxu0 0.0
    %90 = vmatprep.subr.mxu0 0.0
    %91 = vmatpush1.msra.mxu0 0.0
    %92 = vmatprep.subr.mxu0 0.0
    %93 = vmatpush1.msra.mxu0 0.0
    %94 = vmatprep.subr.mxu0 0.0
    %95 = vmatpush1.msra.mxu0 0.0
    %96 = vmatprep.subr.mxu0 0.0
    %97 = vmatpush1.msra.mxu0 0.0
    %98 = vmatprep.subr.mxu0 0.0
    %99 = vmatpush1.msra.mxu0 0.0
    %100 = vmatprep.subr.mxu0 0.0
    %101 = vmatpush1.msra.mxu0 0.0
    %102 = vmatprep.subr.mxu0 0.0
    %103 = vmatpush1.msra.mxu0 0.0
    %104 = vmatprep.subr.mxu0 0.0
    %105 = vmatpush1.msra.mxu0 0.0
    %106 = vmatprep.mubr.f32.mxu0 0.0
    %v107 = vand.u32 %v35, 4294901760
    %v108 = vsub.f32 %v35, %v107
    %v109 = vand.u32 %v108, 4294901760
    %v110 = vsub.f32 %v108, %v109
    %v111 = vand.u32 %v110, 4294901760
    %112 = vmatmul.mubr.f32.gmra.mrb[0].mxu0 %v111
    %v113 = vpop.f32.mrb[0].mxu0
    %v114 = vadd.f32 %v32, %v113
    %v115 = vpop.f32.mrb[0].mxu0
    %116 = vdwg.mxu0
    %117 = vmatprep.subr.mxu0 0.0
    %v118 = vand.u32 %v39, 4294901760
    %v119 = vsub.f32 %v39, %v118
    %v120 = vand.u32 %v119, 4294901760
    %v121 = vsub.f32 %v119, %v120
    %v122 = vand.u32 %v121, 4294901760
    %123 = vmatpush1.msra.mxu0 %v122
    %124 = vmatprep.subr.mxu0 0.0
    %125 = vmatpush1.msra.mxu0 0.0
    %126 = vmatprep.subr.mxu0 0.0
    %127 = vmatpush1.msra.mxu0 0.0
    %128 = vmatprep.subr.mxu0 0.0
    %129 = vmatpush1.msra.mxu0 0.0
    %130 = vmatprep.subr.mxu0 0.0
    %131 = vmatpush1.msra.mxu0 0.0
    %132 = vmatprep.subr.mxu0 0.0
    %133 = vmatpush1.msra.mxu0 0.0
    %134 = vmatprep.subr.mxu0 0.0
    %135 = vmatpush1.msra.mxu0 0.0
    %136 = vmatprep.subr.mxu0 0.0
    %137 = vmatpush1.msra.mxu0 0.0
    %138 = vmatprep.subr.mxu0 0.0
    %139 = vmatpush1.msra.mxu0 0.0
    %140 = vmatprep.subr.mxu0 0.0
    %141 = vmatpush1.msra.mxu0 0.0
    %142 = vmatprep.subr.mxu0 0.0
    %143 = vmatpush1.msra.mxu0 0.0
    %144 = vmatprep.subr.mxu0 0.0
    %145 = vmatpush1.msra.mxu0 0.0
    %146 = vmatprep.subr.mxu0 0.0
    %147 = vmatpush1.msra.mxu0 0.0
    %148 = vmatprep.subr.mxu0 0.0
    %149 = vmatpush1.msra.mxu0 0.0
    %150 = vmatprep.subr.mxu0 0.0
    %151 = vmatpush1.msra.mxu0 0.0
    %152 = vmatprep.subr.mxu0 0.0
    %153 = vmatpush1.msra.mxu0 0.0
    %154 = vmatprep.subr.mxu0 0.0
    %155 = vmatpush1.msra.mxu0 0.0
    %156 = vmatprep.subr.mxu0 0.0
    %157 = vmatpush1.msra.mxu0 0.0
    %158 = vmatprep.subr.mxu0 0.0
    %159 = vmatpush1.msra.mxu0 0.0
    %160 = vmatprep.subr.mxu0 0.0
    %161 = vmatpush1.msra.mxu0 0.0
    %162 = vmatprep.subr.mxu0 0.0
    %163 = vmatpush1.msra.mxu0 0.0
    %164 = vmatprep.subr.mxu0 0.0
    %165 = vmatpush1.msra.mxu0 0.0
    %166 = vmatprep.subr.mxu0 0.0
    %167 = vmatpush1.msra.mxu0 0.0
    %168 = vmatprep.subr.mxu0 0.0
    %169 = vmatpush1.msra.mxu0 0.0
    %170 = vmatprep.subr.mxu0 0.0
    %171 = vmatpush1.msra.mxu0 0.0
    %172 = vmatprep.subr.mxu0 0.0
    %173 = vmatpush1.msra.mxu0 0.0
    %174 = vmatprep.subr.mxu0 0.0
    %175 = vmatpush1.msra.mxu0 0.0
    %176 = vmatprep.subr.mxu0 0.0
    %177 = vmatpush1.msra.mxu0 0.0
    %178 = vmatprep.subr.mxu0 0.0
    %179 = vmatpush1.msra.mxu0 0.0
    %180 = vmatprep.subr.mxu0 0.0
    %181 = vmatpush1.msra.mxu0 0.0
    %182 = vmatprep.subr.mxu0 0.0
    %183 = vmatpush1.msra.mxu0 0.0
    %184 = vmatprep.subr.mxu0 0.0
    %185 = vmatpush1.msra.mxu0 0.0
    %186 = vmatprep.mubr.f32.mxu0 0.0
    %v187 = vand.u32 %v35, 4294901760
    %188 = vmatmul.mubr.f32.gmra.mrb[0].mxu0 %v187
    %v189 = vpop.f32.mrb[0].mxu0
    %v190 = vadd.f32 %v114, %v189
    %v191 = vpop.f32.mrb[0].mxu0
    %192 = vdwg.mxu0
    %193 = vmatprep.subr.mxu0 0.0
    %v194 = vand.u32 %v39, 4294901760
    %v195 = vsub.f32 %v39, %v194
    %196 = vmatpush1.msra.mxu0 %v195
    %197 = vmatprep.subr.mxu0 0.0
    %198 = vmatpush1.msra.mxu0 0.0
    %199 = vmatprep.subr.mxu0 0.0
    %200 = vmatpush1.msra.mxu0 0.0
    %201 = vmatprep.subr.mxu0 0.0
    %202 = vmatpush1.msra.mxu0 0.0
    %203 = vmatprep.subr.mxu0 0.0
    %204 = vmatpush1.msra.mxu0 0.0
    %205 = vmatprep.subr.mxu0 0.0
    %206 = vmatpush1.msra.mxu0 0.0
    %207 = vmatprep.subr.mxu0 0.0
    %208 = vmatpush1.msra.mxu0 0.0
    %209 = vmatprep.subr.mxu0 0.0
    %210 = vmatpush1.msra.mxu0 0.0
    %211 = vmatprep.subr.mxu0 0.0
    %212 = vmatpush1.msra.mxu0 0.0
    %213 = vmatprep.subr.mxu0 0.0
    %214 = vmatpush1.msra.mxu0 0.0
    %215 = vmatprep.subr.mxu0 0.0
    %216 = vmatpush1.msra.mxu0 0.0
    %217 = vmatprep.subr.mxu0 0.0
    %218 = vmatpush1.msra.mxu0 0.0
    %219 = vmatprep.subr.mxu0 0.0
    %220 = vmatpush1.msra.mxu0 0.0
    %221 = vmatprep.subr.mxu0 0.0
    %222 = vmatpush1.msra.mxu0 0.0
    %223 = vmatprep.subr.mxu0 0.0
    %224 = vmatpush1.msra.mxu0 0.0
    %225 = vmatprep.subr.mxu0 0.0
    %226 = vmatpush1.msra.mxu0 0.0
    %227 = vmatprep.subr.mxu0 0.0
    %228 = vmatpush1.msra.mxu0 0.0
    %229 = vmatprep.subr.mxu0 0.0
    %230 = vmatpush1.msra.mxu0 0.0
    %231 = vmatprep.subr.mxu0 0.0
    %232 = vmatpush1.msra.mxu0 0.0
    %233 = vmatprep.subr.mxu0 0.0
    %234 = vmatpush1.msra.mxu0 0.0
    %235 = vmatprep.subr.mxu0 0.0
    %236 = vmatpush1.msra.mxu0 0.0
    %237 = vmatprep.subr.mxu0 0.0
    %238 = vmatpush1.msra.mxu0 0.0
    %239 = vmatprep.subr.mxu0 0.0
    %240 = vmatpush1.msra.mxu0 0.0
    %241 = vmatprep.subr.mxu0 0.0
    %242 = vmatpush1.msra.mxu0 0.0
    %243 = vmatprep.subr.mxu0 0.0
    %244 = vmatpush1.msra.mxu0 0.0
    %245 = vmatprep.subr.mxu0 0.0
    %246 = vmatpush1.msra.mxu0 0.0
    %247 = vmatprep.subr.mxu0 0.0
    %248 = vmatpush1.msra.mxu0 0.0
    %249 = vmatprep.subr.mxu0 0.0
    %250 = vmatpush1.msra.mxu0 0.0
    %251 = vmatprep.subr.mxu0 0.0
    %252 = vmatpush1.msra.mxu0 0.0
    %253 = vmatprep.subr.mxu0 0.0
    %254 = vmatpush1.msra.mxu0 0.0
    %255 = vmatprep.subr.mxu0 0.0
    %256 = vmatpush1.msra.mxu0 0.0
    %257 = vmatprep.subr.mxu0 0.0
    %258 = vmatpush1.msra.mxu0 0.0
    %259 = vmatprep.mubr.f32.mxu0 0.0
    %v260 = vand.u32 %v35, 4294901760
    %v261 = vsub.f32 %v35, %v260
    %262 = vmatmul.mubr.f32.gmra.mrb[0].mxu0 %v261
    %v263 = vpop.f32.mrb[0].mxu0
    %v264 = vadd.f32 %v190, %v263
    %v265 = vpop.f32.mrb[0].mxu0
    %266 = vdwg.mxu0
    %267 = vmatprep.subr.mxu0 0.0
    %v268 = vand.u32 %v39, 4294901760
    %269 = vmatpush1.msra.mxu0 %v268
    %270 = vmatprep.subr.mxu0 0.0
    %271 = vmatpush1.msra.mxu0 0.0
    %272 = vmatprep.subr.mxu0 0.0
    %273 = vmatpush1.msra.mxu0 0.0
    %274 = vmatprep.subr.mxu0 0.0
    %275 = vmatpush1.msra.mxu0 0.0
    %276 = vmatprep.subr.mxu0 0.0
    %277 = vmatpush1.msra.mxu0 0.0
    %278 = vmatprep.subr.mxu0 0.0
    %279 = vmatpush1.msra.mxu0 0.0
    %280 = vmatprep.subr.mxu0 0.0
    %281 = vmatpush1.msra.mxu0 0.0
    %282 = vmatprep.subr.mxu0 0.0
    %283 = vmatpush1.msra.mxu0 0.0
    %284 = vmatprep.subr.mxu0 0.0
    %285 = vmatpush1.msra.mxu0 0.0
    %286 = vmatprep.subr.mxu0 0.0
    %287 = vmatpush1.msra.mxu0 0.0
    %288 = vmatprep.subr.mxu0 0.0
    %289 = vmatpush1.msra.mxu0 0.0
    %290 = vmatprep.subr.mxu0 0.0
    %291 = vmatpush1.msra.mxu0 0.0
    %292 = vmatprep.subr.mxu0 0.0
    %293 = vmatpush1.msra.mxu0 0.0
    %294 = vmatprep.subr.mxu0 0.0
    %295 = vmatpush1.msra.mxu0 0.0
    %296 = vmatprep.subr.mxu0 0.0
    %297 = vmatpush1.msra.mxu0 0.0
    %298 = vmatprep.subr.mxu0 0.0
    %299 = vmatpush1.msra.mxu0 0.0
    %300 = vmatprep.subr.mxu0 0.0
    %301 = vmatpush1.msra.mxu0 0.0
    %302 = vmatprep.subr.mxu0 0.0
    %303 = vmatpush1.msra.mxu0 0.0
    %304 = vmatprep.subr.mxu0 0.0
    %305 = vmatpush1.msra.mxu0 0.0
    %306 = vmatprep.subr.mxu0 0.0
    %307 = vmatpush1.msra.mxu0 0.0
    %308 = vmatprep.subr.mxu0 0.0
    %309 = vmatpush1.msra.mxu0 0.0
    %310 = vmatprep.subr.mxu0 0.0
    %311 = vmatpush1.msra.mxu0 0.0
    %312 = vmatprep.subr.mxu0 0.0
    %313 = vmatpush1.msra.mxu0 0.0
    %314 = vmatprep.subr.mxu0 0.0
    %315 = vmatpush1.msra.mxu0 0.0
    %316 = vmatprep.subr.mxu0 0.0
    %317 = vmatpush1.msra.mxu0 0.0
    %318 = vmatprep.subr.mxu0 0.0
    %319 = vmatpush1.msra.mxu0 0.0
    %320 = vmatprep.subr.mxu0 0.0
    %321 = vmatpush1.msra.mxu0 0.0
    %322 = vmatprep.subr.mxu0 0.0
    %323 = vmatpush1.msra.mxu0 0.0
    %324 = vmatprep.subr.mxu0 0.0
    %325 = vmatpush1.msra.mxu0 0.0
    %326 = vmatprep.subr.mxu0 0.0
    %327 = vmatpush1.msra.mxu0 0.0
    %328 = vmatprep.subr.mxu0 0.0
    %329 = vmatpush1.msra.mxu0 0.0
    %330 = vmatprep.subr.mxu0 0.0
    %331 = vmatpush1.msra.mxu0 0.0
    %332 = vmatprep.mubr.f32.mxu0 0.0
    %v333 = vand.u32 %v35, 4294901760
    %v334 = vsub.f32 %v35, %v333
    %v335 = vand.u32 %v334, 4294901760
    %336 = vmatmul.mubr.f32.gmra.mrb[0].mxu0 %v335
    %v337 = vpop.f32.mrb[0].mxu0
    %v338 = vadd.f32 %v264, %v337
    %v339 = vpop.f32.mrb[0].mxu0
    %340 = vdwg.mxu0
    %341 = vmatprep.subr.mxu0 0.0
    %v342 = vand.u32 %v39, 4294901760
    %v343 = vsub.f32 %v39, %v342
    %v344 = vand.u32 %v343, 4294901760
    %345 = vmatpush1.msra.mxu0 %v344
    %346 = vmatprep.subr.mxu0 0.0
    %347 = vmatpush1.msra.mxu0 0.0
    %348 = vmatprep.subr.mxu0 0.0
    %349 = vmatpush1.msra.mxu0 0.0
    %350 = vmatprep.subr.mxu0 0.0
    %351 = vmatpush1.msra.mxu0 0.0
    %352 = vmatprep.subr.mxu0 0.0
    %353 = vmatpush1.msra.mxu0 0.0
    %354 = vmatprep.subr.mxu0 0.0
    %355 = vmatpush1.msra.mxu0 0.0
    %356 = vmatprep.subr.mxu0 0.0
    %357 = vmatpush1.msra.mxu0 0.0
    %358 = vmatprep.subr.mxu0 0.0
    %359 = vmatpush1.msra.mxu0 0.0
    %360 = vmatprep.subr.mxu0 0.0
    %361 = vmatpush1.msra.mxu0 0.0
    %362 = vmatprep.subr.mxu0 0.0
    %363 = vmatpush1.msra.mxu0 0.0
    %364 = vmatprep.subr.mxu0 0.0
    %365 = vmatpush1.msra.mxu0 0.0
    %366 = vmatprep.subr.mxu0 0.0
    %367 = vmatpush1.msra.mxu0 0.0
    %368 = vmatprep.subr.mxu0 0.0
    %369 = vmatpush1.msra.mxu0 0.0
    %370 = vmatprep.subr.mxu0 0.0
    %371 = vmatpush1.msra.mxu0 0.0
    %372 = vmatprep.subr.mxu0 0.0
    %373 = vmatpush1.msra.mxu0 0.0
    %374 = vmatprep.subr.mxu0 0.0
    %375 = vmatpush1.msra.mxu0 0.0
    %376 = vmatprep.subr.mxu0 0.0
    %377 = vmatpush1.msra.mxu0 0.0
    %378 = vmatprep.subr.mxu0 0.0
    %379 = vmatpush1.msra.mxu0 0.0
    %380 = vmatprep.subr.mxu0 0.0
    %381 = vmatpush1.msra.mxu0 0.0
    %382 = vmatprep.subr.mxu0 0.0
    %383 = vmatpush1.msra.mxu0 0.0
    %384 = vmatprep.subr.mxu0 0.0
    %385 = vmatpush1.msra.mxu0 0.0
    %386 = vmatprep.subr.mxu0 0.0
    %387 = vmatpush1.msra.mxu0 0.0
    %388 = vmatprep.subr.mxu0 0.0
    %389 = vmatpush1.msra.mxu0 0.0
    %390 = vmatprep.subr.mxu0 0.0
    %391 = vmatpush1.msra.mxu0 0.0
    %392 = vmatprep.subr.mxu0 0.0
    %393 = vmatpush1.msra.mxu0 0.0
    %394 = vmatprep.subr.mxu0 0.0
    %395 = vmatpush1.msra.mxu0 0.0
    %396 = vmatprep.subr.mxu0 0.0
    %397 = vmatpush1.msra.mxu0 0.0
    %398 = vmatprep.subr.mxu0 0.0
    %399 = vmatpush1.msra.mxu0 0.0
    %400 = vmatprep.subr.mxu0 0.0
    %401 = vmatpush1.msra.mxu0 0.0
    %402 = vmatprep.subr.mxu0 0.0
    %403 = vmatpush1.msra.mxu0 0.0
    %404 = vmatprep.subr.mxu0 0.0
    %405 = vmatpush1.msra.mxu0 0.0
    %406 = vmatprep.subr.mxu0 0.0
    %407 = vmatpush1.msra.mxu0 0.0
    %408 = vmatprep.mubr.f32.mxu0 0.0
    %v409 = vand.u32 %v35, 4294901760
    %410 = vmatmul.mubr.f32.gmra.mrb[0].mxu0 %v409
    %v411 = vpop.f32.mrb[0].mxu0
    %v412 = vadd.f32 %v338, %v411
    %v413 = vpop.f32.mrb[0].mxu0
    %414 = vdwg.mxu0
    %415 = vmatprep.subr.mxu0 0.0
    %v416 = vand.u32 %v39, 4294901760
    %417 = vmatpush1.msra.mxu0 %v416
    %418 = vmatprep.subr.mxu0 0.0
    %419 = vmatpush1.msra.mxu0 0.0
    %420 = vmatprep.subr.mxu0 0.0
    %421 = vmatpush1.msra.mxu0 0.0
    %422 = vmatprep.subr.mxu0 0.0
    %423 = vmatpush1.msra.mxu0 0.0
    %424 = vmatprep.subr.mxu0 0.0
    %425 = vmatpush1.msra.mxu0 0.0
    %426 = vmatprep.subr.mxu0 0.0
    %427 = vmatpush1.msra.mxu0 0.0
    %428 = vmatprep.subr.mxu0 0.0
    %429 = vmatpush1.msra.mxu0 0.0
    %430 = vmatprep.subr.mxu0 0.0
    %431 = vmatpush1.msra.mxu0 0.0
    %432 = vmatprep.subr.mxu0 0.0
    %433 = vmatpush1.msra.mxu0 0.0
    %434 = vmatprep.subr.mxu0 0.0
    %435 = vmatpush1.msra.mxu0 0.0
    %436 = vmatprep.subr.mxu0 0.0
    %437 = vmatpush1.msra.mxu0 0.0
    %438 = vmatprep.subr.mxu0 0.0
    %439 = vmatpush1.msra.mxu0 0.0
    %440 = vmatprep.subr.mxu0 0.0
    %441 = vmatpush1.msra.mxu0 0.0
    %442 = vmatprep.subr.mxu0 0.0
    %443 = vmatpush1.msra.mxu0 0.0
    %444 = vmatprep.subr.mxu0 0.0
    %445 = vmatpush1.msra.mxu0 0.0
    %446 = vmatprep.subr.mxu0 0.0
    %447 = vmatpush1.msra.mxu0 0.0
    %448 = vmatprep.subr.mxu0 0.0
    %449 = vmatpush1.msra.mxu0 0.0
    %450 = vmatprep.subr.mxu0 0.0
    %451 = vmatpush1.msra.mxu0 0.0
    %452 = vmatprep.subr.mxu0 0.0
    %453 = vmatpush1.msra.mxu0 0.0
    %454 = vmatprep.subr.mxu0 0.0
    %455 = vmatpush1.msra.mxu0 0.0
    %456 = vmatprep.subr.mxu0 0.0
    %457 = vmatpush1.msra.mxu0 0.0
    %458 = vmatprep.subr.mxu0 0.0
    %459 = vmatpush1.msra.mxu0 0.0
    %460 = vmatprep.subr.mxu0 0.0
    %461 = vmatpush1.msra.mxu0 0.0
    %462 = vmatprep.subr.mxu0 0.0
    %463 = vmatpush1.msra.mxu0 0.0
    %464 = vmatprep.subr.mxu0 0.0
    %465 = vmatpush1.msra.mxu0 0.0
    %466 = vmatprep.subr.mxu0 0.0
    %467 = vmatpush1.msra.mxu0 0.0
    %468 = vmatprep.subr.mxu0 0.0
    %469 = vmatpush1.msra.mxu0 0.0
    %470 = vmatprep.subr.mxu0 0.0
    %471 = vmatpush1.msra.mxu0 0.0
    %472 = vmatprep.subr.mxu0 0.0
    %473 = vmatpush1.msra.mxu0 0.0
    %474 = vmatprep.subr.mxu0 0.0
    %475 = vmatpush1.msra.mxu0 0.0
    %476 = vmatprep.subr.mxu0 0.0
    %477 = vmatpush1.msra.mxu0 0.0
    %478 = vmatprep.subr.mxu0 0.0
    %479 = vmatpush1.msra.mxu0 0.0
    %480 = vmatprep.mubr.f32.mxu0 0.0
    %v481 = vand.u32 %v35, 4294901760
    %482 = vmatmul.mubr.f32.gmra.mrb[0].mxu0 %v481
    %v483 = vpop.f32.mrb[0].mxu0
    %v484 = vadd.f32 %v412, %v483
    %v485 = vpop.f32.mrb[0].mxu0
    %486 = vdwg.mxu0
    %v487 = vmax.f32 %v484, 0.0
    %v488 = vld [vmem:[#allocation2 + $0x10] sm:$0xff]
    %v489 = vld [vmem:[#allocation2 + $0x18] sm:$0xff]
    %v490 = vld [vmem:[#allocation2 + $0x20] sm:$0xff]
    %v491 = vld [vmem:[#allocation2 + $0x28] sm:$0xff]
    %v492 = vld [vmem:[#allocation2 + $0x30] sm:$0xff]
    %v493 = vld [vmem:[#allocation2 + $0x38] sm:$0xff]
    %v494 = vld [vmem:[#allocation2 + $0x40] sm:$0xff]
    %v495 = vld [vmem:[#allocation2 + $0x48] sm:$0xff]
    %v496 = vld [vmem:[#allocation2 + $0x50] sm:$0xff]
    %v497 = vld [vmem:[#allocation2 + $0x58] sm:$0xff]
    %v498 = vld [vmem:[#allocation2 + $0x60] sm:$0xff]
    %v499 = vld [vmem:[#allocation2 + $0x68] sm:$0xff]
    %v500 = vld [vmem:[#allocation2 + $0x70] sm:$0xff]
    %v501 = vld [vmem:[#allocation2 + $0x78] sm:$0xff]
    %v502 = vld [vmem:[#allocation2 + $0x80] sm:$0xff]
    %v503 = vld [vmem:[#allocation2 + $0x88] sm:$0xff]
    %v504 = vld [vmem:[#allocation2 + $0x90] sm:$0x1]
    %v505 = vlaneseq
    %v506 = vshrl.u32 %v505, 7
    %v507 = vsub.s32 0, %v506
    %v508 = vrot.slane %v504, %v507
    %509 = vmatprep.subr.mxu0 0.0
    %v510 = vand.u32 %v488, 4294901760
    %511 = vmatpush1.msra.mxu0 %v510
    %512 = vmatprep.subr.mxu0 0.0
    %v513 = vand.u32 %v489, 4294901760
    %514 = vmatpush1.msra.mxu0 %v513
    %515 = vmatprep.subr.mxu0 0.0
    %v516 = vand.u32 %v490, 4294901760
    %517 = vmatpush1.msra.mxu0 %v516
    %518 = vmatprep.subr.mxu0 0.0
    %v519 = vand.u32 %v491, 4294901760
    %520 = vmatpush1.msra.mxu0 %v519
    %521 = vmatprep.subr.mxu0 0.0
    %v522 = vand.u32 %v492, 4294901760
    %523 = vmatpush1.msra.mxu0 %v522
    %524 = vmatprep.subr.mxu0 0.0
    %v525 = vand.u32 %v493, 4294901760
    %526 = vmatpush1.msra.mxu0 %v525
    %527 = vmatprep.subr.mxu0 0.0
    %v528 = vand.u32 %v494, 4294901760
    %529 = vmatpush1.msra.mxu0 %v528
    %530 = vmatprep.subr.mxu0 0.0
    %v531 = vand.u32 %v495, 4294901760
    %532 = vmatpush1.msra.mxu0 %v531
    %533 = vmatprep.subr.mxu0 0.0
    %v534 = vand.u32 %v496, 4294901760
    %535 = vmatpush1.msra.mxu0 %v534
    %536 = vmatprep.subr.mxu0 0.0
    %v537 = vand.u32 %v497, 4294901760
    %538 = vmatpush1.msra.mxu0 %v537
    %539 = vmatprep.subr.mxu0 0.0
    %v540 = vand.u32 %v498, 4294901760
    %541 = vmatpush1.msra.mxu0 %v540
    %542 = vmatprep.subr.mxu0 0.0
    %v543 = vand.u32 %v499, 4294901760
    %544 = vmatpush1.msra.mxu0 %v543
    %545 = vmatprep.subr.mxu0 0.0
    %v546 = vand.u32 %v500, 4294901760
    %547 = vmatpush1.msra.mxu0 %v546
    %548 = vmatprep.subr.mxu0 0.0
    %v549 = vand.u32 %v501, 4294901760
    %550 = vmatpush1.msra.mxu0 %v549
    %551 = vmatprep.subr.mxu0 0.0
    %v552 = vand.u32 %v502, 4294901760
    %553 = vmatpush1.msra.mxu0 %v552
    %554 = vmatprep.subr.mxu0 0.0
    %v555 = vand.u32 %v503, 4294901760
    %556 = vmatpush1.msra.mxu0 %v555
    %557 = vmatprep.subr.mxu0 0.0
    %558 = vmatpush1.msra.mxu0 0.0
    %559 = vmatprep.subr.mxu0 0.0
    %560 = vmatpush1.msra.mxu0 0.0
    %561 = vmatprep.subr.mxu0 0.0
    %562 = vmatpush1.msra.mxu0 0.0
    %563 = vmatprep.subr.mxu0 0.0
    %564 = vmatpush1.msra.mxu0 0.0
    %565 = vmatprep.subr.mxu0 0.0
    %566 = vmatpush1.msra.mxu0 0.0
    %567 = vmatprep.subr.mxu0 0.0
    %568 = vmatpush1.msra.mxu0 0.0
    %569 = vmatprep.subr.mxu0 0.0
    %570 = vmatpush1.msra.mxu0 0.0
    %571 = vmatprep.subr.mxu0 0.0
    %572 = vmatpush1.msra.mxu0 0.0
    %573 = vmatprep.subr.mxu0 0.0
    %574 = vmatpush1.msra.mxu0 0.0
    %575 = vmatprep.subr.mxu0 0.0
    %576 = vmatpush1.msra.mxu0 0.0
    %577 = vmatprep.subr.mxu0 0.0
    %578 = vmatpush1.msra.mxu0 0.0
    %579 = vmatprep.subr.mxu0 0.0
    %580 = vmatpush1.msra.mxu0 0.0
    %581 = vmatprep.subr.mxu0 0.0
    %582 = vmatpush1.msra.mxu0 0.0
    %583 = vmatprep.subr.mxu0 0.0
    %584 = vmatpush1.msra.mxu0 0.0
    %585 = vmatprep.subr.mxu0 0.0
    %586 = vmatpush1.msra.mxu0 0.0
    %587 = vmatprep.subr.mxu0 0.0
    %588 = vmatpush1.msra.mxu0 0.0
    %589 = vmatprep.mubr.f32.mxu0 0.0
    %v590 = vand.u32 %v487, 4294901760
    %v591 = vsub.f32 %v487, %v590
    %v592 = vand.u32 %v591, 4294901760
    %v593 = vsub.f32 %v591, %v592
    %v594 = vand.u32 %v593, 4294901760
    %595 = vmatmul.mubr.f32.gmra.mrb[0].mxu0 %v594
    %v596 = vpop.f32.mrb[0].mxu0
    %v597 = vadd.f32 %v508, %v596
    %v598 = vpop.f32.mrb[0].mxu0
    %599 = vdwg.mxu0
    %600 = vmatprep.subr.mxu0 0.0
    %v601 = vand.u32 %v488, 4294901760
    %v602 = vsub.f32 %v488, %v601
    %v603 = vand.u32 %v602, 4294901760
    %v604 = vsub.f32 %v602, %v603
    %v605 = vand.u32 %v604, 4294901760
    %606 = vmatpush1.msra.mxu0 %v605
    %607 = vmatprep.subr.mxu0 0.0
    %v608 = vand.u32 %v489, 4294901760
    %v609 = vsub.f32 %v489, %v608
    %v610 = vand.u32 %v609, 4294901760
    %v611 = vsub.f32 %v609, %v610
    %v612 = vand.u32 %v611, 4294901760
    %613 = vmatpush1.msra.mxu0 %v612
    %614 = vmatprep.subr.mxu0 0.0
    %v615 = vand.u32 %v490, 4294901760
    %v616 = vsub.f32 %v490, %v615
    %v617 = vand.u32 %v616, 4294901760
    %v618 = vsub.f32 %v616, %v617
    %v619 = vand.u32 %v618, 4294901760
    %620 = vmatpush1.msra.mxu0 %v619
    %621 = vmatprep.subr.mxu0 0.0
    %v622 = vand.u32 %v491, 4294901760
    %v623 = vsub.f32 %v491, %v622
    %v624 = vand.u32 %v623, 4294901760
    %v625 = vsub.f32 %v623, %v624
    %v626 = vand.u32 %v625, 4294901760
    %627 = vmatpush1.msra.mxu0 %v626
    %628 = vmatprep.subr.mxu0 0.0
    %v629 = vand.u32 %v492, 4294901760
    %v630 = vsub.f32 %v492, %v629
    %v631 = vand.u32 %v630, 4294901760
    %v632 = vsub.f32 %v630, %v631
    %v633 = vand.u32 %v632, 4294901760
    %634 = vmatpush1.msra.mxu0 %v633
    %635 = vmatprep.subr.mxu0 0.0
    %v636 = vand.u32 %v493, 4294901760
    %v637 = vsub.f32 %v493, %v636
    %v638 = vand.u32 %v637, 4294901760
    %v639 = vsub.f32 %v637, %v638
    %v640 = vand.u32 %v639, 4294901760
    %641 = vmatpush1.msra.mxu0 %v640
    %642 = vmatprep.subr.mxu0 0.0
    %v643 = vand.u32 %v494, 4294901760
    %v644 = vsub.f32 %v494, %v643
    %v645 = vand.u32 %v644, 4294901760
    %v646 = vsub.f32 %v644, %v645
    %v647 = vand.u32 %v646, 4294901760
    %648 = vmatpush1.msra.mxu0 %v647
    %649 = vmatprep.subr.mxu0 0.0
    %v650 = vand.u32 %v495, 4294901760
    %v651 = vsub.f32 %v495, %v650
    %v652 = vand.u32 %v651, 4294901760
    %v653 = vsub.f32 %v651, %v652
    %v654 = vand.u32 %v653, 4294901760
    %655 = vmatpush1.msra.mxu0 %v654
    %656 = vmatprep.subr.mxu0 0.0
    %v657 = vand.u32 %v496, 4294901760
    %v658 = vsub.f32 %v496, %v657
    %v659 = vand.u32 %v658, 4294901760
    %v660 = vsub.f32 %v658, %v659
    %v661 = vand.u32 %v660, 4294901760
    %662 = vmatpush1.msra.mxu0 %v661
    %663 = vmatprep.subr.mxu0 0.0
    %v664 = vand.u32 %v497, 4294901760
    %v665 = vsub.f32 %v497, %v664
    %v666 = vand.u32 %v665, 4294901760
    %v667 = vsub.f32 %v665, %v666
    %v668 = vand.u32 %v667, 4294901760
    %669 = vmatpush1.msra.mxu0 %v668
    %670 = vmatprep.subr.mxu0 0.0
    %v671 = vand.u32 %v498, 4294901760
    %v672 = vsub.f32 %v498, %v671
    %v673 = vand.u32 %v672, 4294901760
    %v674 = vsub.f32 %v672, %v673
    %v675 = vand.u32 %v674, 4294901760
    %676 = vmatpush1.msra.mxu0 %v675
    %677 = vmatprep.subr.mxu0 0.0
    %v678 = vand.u32 %v499, 4294901760
    %v679 = vsub.f32 %v499, %v678
    %v680 = vand.u32 %v679, 4294901760
    %v681 = vsub.f32 %v679, %v680
    %v682 = vand.u32 %v681, 4294901760
    %683 = vmatpush1.msra.mxu0 %v682
    %684 = vmatprep.subr.mxu0 0.0
    %v685 = vand.u32 %v500, 4294901760
    %v686 = vsub.f32 %v500, %v685
    %v687 = vand.u32 %v686, 4294901760
    %v688 = vsub.f32 %v686, %v687
    %v689 = vand.u32 %v688, 4294901760
    %690 = vmatpush1.msra.mxu0 %v689
    %691 = vmatprep.subr.mxu0 0.0
    %v692 = vand.u32 %v501, 4294901760
    %v693 = vsub.f32 %v501, %v692
    %v694 = vand.u32 %v693, 4294901760
    %v695 = vsub.f32 %v693, %v694
    %v696 = vand.u32 %v695, 4294901760
    %697 = vmatpush1.msra.mxu0 %v696
    %698 = vmatprep.subr.mxu0 0.0
    %v699 = vand.u32 %v502, 4294901760
    %v700 = vsub.f32 %v502, %v699
    %v701 = vand.u32 %v700, 4294901760
    %v702 = vsub.f32 %v700, %v701
    %v703 = vand.u32 %v702, 4294901760
    %704 = vmatpush1.msra.mxu0 %v703
    %705 = vmatprep.subr.mxu0 0.0
    %v706 = vand.u32 %v503, 4294901760
    %v707 = vsub.f32 %v503, %v706
    %v708 = vand.u32 %v707, 4294901760
    %v709 = vsub.f32 %v707, %v708
    %v710 = vand.u32 %v709, 4294901760
    %711 = vmatpush1.msra.mxu0 %v710
    %712 = vmatprep.subr.mxu0 0.0
    %713 = vmatpush1.msra.mxu0 0.0
    %714 = vmatprep.subr.mxu0 0.0
    %715 = vmatpush1.msra.mxu0 0.0
    %716 = vmatprep.subr.mxu0 0.0
    %717 = vmatpush1.msra.mxu0 0.0
    %718 = vmatprep.subr.mxu0 0.0
    %719 = vmatpush1.msra.mxu0 0.0
    %720 = vmatprep.subr.mxu0 0.0
    %721 = vmatpush1.msra.mxu0 0.0
    %722 = vmatprep.subr.mxu0 0.0
    %723 = vmatpush1.msra.mxu0 0.0
    %724 = vmatprep.subr.mxu0 0.0
    %725 = vmatpush1.msra.mxu0 0.0
    %726 = vmatprep.subr.mxu0 0.0
    %727 = vmatpush1.msra.mxu0 0.0
    %728 = vmatprep.subr.mxu0 0.0
    %729 = vmatpush1.msra.mxu0 0.0
    %730 = vmatprep.subr.mxu0 0.0
    %731 = vmatpush1.msra.mxu0 0.0
    %732 = vmatprep.subr.mxu0 0.0
    %733 = vmatpush1.msra.mxu0 0.0
    %734 = vmatprep.subr.mxu0 0.0
    %735 = vmatpush1.msra.mxu0 0.0
    %736 = vmatprep.subr.mxu0 0.0
    %737 = vmatpush1.msra.mxu0 0.0
    %738 = vmatprep.subr.mxu0 0.0
    %739 = vmatpush1.msra.mxu0 0.0
    %740 = vmatprep.subr.mxu0 0.0
    %741 = vmatpush1.msra.mxu0 0.0
    %742 = vmatprep.subr.mxu0 0.0
    %743 = vmatpush1.msra.mxu0 0.0
    %744 = vmatprep.mubr.f32.mxu0 0.0
    %v745 = vand.u32 %v487, 4294901760
    %746 = vmatmul.mubr.f32.gmra.mrb[0].mxu0 %v745
    %v747 = vpop.f32.mrb[0].mxu0
    %v748 = vadd.f32 %v597, %v747
    %v749 = vpop.f32.mrb[0].mxu0
    %750 = vdwg.mxu0
    %751 = vmatprep.subr.mxu0 0.0
    %v752 = vand.u32 %v488, 4294901760
    %v753 = vsub.f32 %v488, %v752
    %754 = vmatpush1.msra.mxu0 %v753
    %755 = vmatprep.subr.mxu0 0.0
    %v756 = vand.u32 %v489, 4294901760
    %v757 = vsub.f32 %v489, %v756
    %758 = vmatpush1.msra.mxu0 %v757
    %759 = vmatprep.subr.mxu0 0.0
    %v760 = vand.u32 %v490, 4294901760
    %v761 = vsub.f32 %v490, %v760
    %762 = vmatpush1.msra.mxu0 %v761
    %763 = vmatprep.subr.mxu0 0.0
    %v764 = vand.u32 %v491, 4294901760
    %v765 = vsub.f32 %v491, %v764
    %766 = vmatpush1.msra.mxu0 %v765
    %767 = vmatprep.subr.mxu0 0.0
    %v768 = vand.u32 %v492, 4294901760
    %v769 = vsub.f32 %v492, %v768
    %770 = vmatpush1.msra.mxu0 %v769
    %771 = vmatprep.subr.mxu0 0.0
    %v772 = vand.u32 %v493, 4294901760
    %v773 = vsub.f32 %v493, %v772
    %774 = vmatpush1.msra.mxu0 %v773
    %775 = vmatprep.subr.mxu0 0.0
    %v776 = vand.u32 %v494, 4294901760
    %v777 = vsub.f32 %v494, %v776
    %778 = vmatpush1.msra.mxu0 %v777
    %779 = vmatprep.subr.mxu0 0.0
    %v780 = vand.u32 %v495, 4294901760
    %v781 = vsub.f32 %v495, %v780
    %782 = vmatpush1.msra.mxu0 %v781
    %783 = vmatprep.subr.mxu0 0.0
    %v784 = vand.u32 %v496, 4294901760
    %v785 = vsub.f32 %v496, %v784
    %786 = vmatpush1.msra.mxu0 %v785
    %787 = vmatprep.subr.mxu0 0.0
    %v788 = vand.u32 %v497, 4294901760
    %v789 = vsub.f32 %v497, %v788
    %790 = vmatpush1.msra.mxu0 %v789
    %791 = vmatprep.subr.mxu0 0.0
    %v792 = vand.u32 %v498, 4294901760
    %v793 = vsub.f32 %v498, %v792
    %794 = vmatpush1.msra.mxu0 %v793
    %795 = vmatprep.subr.mxu0 0.0
    %v796 = vand.u32 %v499, 4294901760
    %v797 = vsub.f32 %v499, %v796
    %798 = vmatpush1.msra.mxu0 %v797
    %799 = vmatprep.subr.mxu0 0.0
    %v800 = vand.u32 %v500, 4294901760
    %v801 = vsub.f32 %v500, %v800
    %802 = vmatpush1.msra.mxu0 %v801
    %803 = vmatprep.subr.mxu0 0.0
    %v804 = vand.u32 %v501, 4294901760
    %v805 = vsub.f32 %v501, %v804
    %806 = vmatpush1.msra.mxu0 %v805
    %807 = vmatprep.subr.mxu0 0.0
    %v808 = vand.u32 %v502, 4294901760
    %v809 = vsub.f32 %v502, %v808
    %810 = vmatpush1.msra.mxu0 %v809
    %811 = vmatprep.subr.mxu0 0.0
    %v812 = vand.u32 %v503, 4294901760
    %v813 = vsub.f32 %v503, %v812
    %814 = vmatpush1.msra.mxu0 %v813
    %815 = vmatprep.subr.mxu0 0.0
    %816 = vmatpush1.msra.mxu0 0.0
    %817 = vmatprep.subr.mxu0 0.0
    %818 = vmatpush1.msra.mxu0 0.0
    %819 = vmatprep.subr.mxu0 0.0
    %820 = vmatpush1.msra.mxu0 0.0
    %821 = vmatprep.subr.mxu0 0.0
    %822 = vmatpush1.msra.mxu0 0.0
    %823 = vmatprep.subr.mxu0 0.0
    %824 = vmatpush1.msra.mxu0 0.0
    %825 = vmatprep.subr.mxu0 0.0
    %826 = vmatpush1.msra.mxu0 0.0
    %827 = vmatprep.subr.mxu0 0.0
    %828 = vmatpush1.msra.mxu0 0.0
    %829 = vmatprep.subr.mxu0 0.0
    %830 = vmatpush1.msra.mxu0 0.0
    %831 = vmatprep.subr.mxu0 0.0
    %832 = vmatpush1.msra.mxu0 0.0
    %833 = vmatprep.subr.mxu0 0.0
    %834 = vmatpush1.msra.mxu0 0.0
    %835 = vmatprep.subr.mxu0 0.0
    %836 = vmatpush1.msra.mxu0 0.0
    %837 = vmatprep.subr.mxu0 0.0
    %838 = vmatpush1.msra.mxu0 0.0
    %839 = vmatprep.subr.mxu0 0.0
    %840 = vmatpush1.msra.mxu0 0.0
    %841 = vmatprep.subr.mxu0 0.0
    %842 = vmatpush1.msra.mxu0 0.0
    %843 = vmatprep.subr.mxu0 0.0
    %844 = vmatpush1.msra.mxu0 0.0
    %845 = vmatprep.subr.mxu0 0.0
    %846 = vmatpush1.msra.mxu0 0.0
    %847 = vmatprep.mubr.f32.mxu0 0.0
    %v848 = vand.u32 %v487, 4294901760
    %v849 = vsub.f32 %v487, %v848
    %850 = vmatmul.mubr.f32.gmra.mrb[0].mxu0 %v849
    %v851 = vpop.f32.mrb[0].mxu0
    %v852 = vadd.f32 %v748, %v851
    %v853 = vpop.f32.mrb[0].mxu0
    %854 = vdwg.mxu0
    %855 = vmatprep.subr.mxu0 0.0
    %v856 = vand.u32 %v488, 4294901760
    %857 = vmatpush1.msra.mxu0 %v856
    %858 = vmatprep.subr.mxu0 0.0
    %v859 = vand.u32 %v489, 4294901760
    %860 = vmatpush1.msra.mxu0 %v859
    %861 = vmatprep.subr.mxu0 0.0
    %v862 = vand.u32 %v490, 4294901760
    %863 = vmatpush1.msra.mxu0 %v862
    %864 = vmatprep.subr.mxu0 0.0
    %v865 = vand.u32 %v491, 4294901760
    %866 = vmatpush1.msra.mxu0 %v865
    %867 = vmatprep.subr.mxu0 0.0
    %v868 = vand.u32 %v492, 4294901760
    %869 = vmatpush1.msra.mxu0 %v868
    %870 = vmatprep.subr.mxu0 0.0
    %v871 = vand.u32 %v493, 4294901760
    %872 = vmatpush1.msra.mxu0 %v871
    %873 = vmatprep.subr.mxu0 0.0
    %v874 = vand.u32 %v494, 4294901760
    %875 = vmatpush1.msra.mxu0 %v874
    %876 = vmatprep.subr.mxu0 0.0
    %v877 = vand.u32 %v495, 4294901760
    %878 = vmatpush1.msra.mxu0 %v877
    %879 = vmatprep.subr.mxu0 0.0
    %v880 = vand.u32 %v496, 4294901760
    %881 = vmatpush1.msra.mxu0 %v880
    %882 = vmatprep.subr.mxu0 0.0
    %v883 = vand.u32 %v497, 4294901760
    %884 = vmatpush1.msra.mxu0 %v883
    %885 = vmatprep.subr.mxu0 0.0
    %v886 = vand.u32 %v498, 4294901760
    %887 = vmatpush1.msra.mxu0 %v886
    %888 = vmatprep.subr.mxu0 0.0
    %v889 = vand.u32 %v499, 4294901760
    %890 = vmatpush1.msra.mxu0 %v889
    %891 = vmatprep.subr.mxu0 0.0
    %v892 = vand.u32 %v500, 4294901760
    %893 = vmatpush1.msra.mxu0 %v892
    %894 = vmatprep.subr.mxu0 0.0
    %v895 = vand.u32 %v501, 4294901760
    %896 = vmatpush1.msra.mxu0 %v895
    %897 = vmatprep.subr.mxu0 0.0
    %v898 = vand.u32 %v502, 4294901760
    %899 = vmatpush1.msra.mxu0 %v898
    %900 = vmatprep.subr.mxu0 0.0
    %v901 = vand.u32 %v503, 4294901760
    %902 = vmatpush1.msra.mxu0 %v901
    %903 = vmatprep.subr.mxu0 0.0
    %904 = vmatpush1.msra.mxu0 0.0
    %905 = vmatprep.subr.mxu0 0.0
    %906 = vmatpush1.msra.mxu0 0.0
    %907 = vmatprep.subr.mxu0 0.0
    %908 = vmatpush1.msra.mxu0 0.0
    %909 = vmatprep.subr.mxu0 0.0
    %910 = vmatpush1.msra.mxu0 0.0
    %911 = vmatprep.subr.mxu0 0.0
    %912 = vmatpush1.msra.mxu0 0.0
    %913 = vmatprep.subr.mxu0 0.0
    %914 = vmatpush1.msra.mxu0 0.0
    %915 = vmatprep.subr.mxu0 0.0
    %916 = vmatpush1.msra.mxu0 0.0
    %917 = vmatprep.subr.mxu0 0.0
    %918 = vmatpush1.msra.mxu0 0.0
    %919 = vmatprep.subr.mxu0 0.0
    %920 = vmatpush1.msra.mxu0 0.0
    %921 = vmatprep.subr.mxu0 0.0
    %922 = vmatpush1.msra.mxu0 0.0
    %923 = vmatprep.subr.mxu0 0.0
    %924 = vmatpush1.msra.mxu0 0.0
    %925 = vmatprep.subr.mxu0 0.0
    %926 = vmatpush1.msra.mxu0 0.0
    %927 = vmatprep.subr.mxu0 0.0
    %928 = vmatpush1.msra.mxu0 0.0
    %929 = vmatprep.subr.mxu0 0.0
    %930 = vmatpush1.msra.mxu0 0.0
    %931 = vmatprep.subr.mxu0 0.0
    %932 = vmatpush1.msra.mxu0 0.0
    %933 = vmatprep.subr.mxu0 0.0
    %934 = vmatpush1.msra.mxu0 0.0
    %935 = vmatprep.mubr.f32.mxu0 0.0
    %v936 = vand.u32 %v487, 4294901760
    %v937 = vsub.f32 %v487, %v936
    %v938 = vand.u32 %v937, 4294901760
    %939 = vmatmul.mubr.f32.gmra.mrb[0].mxu0 %v938
    %v940 = vpop.f32.mrb[0].mxu0
    %v941 = vadd.f32 %v852, %v940
    %v942 = vpop.f32.mrb[0].mxu0
    %943 = vdwg.mxu0
    %944 = vmatprep.subr.mxu0 0.0
    %v945 = vand.u32 %v488, 4294901760
    %v946 = vsub.f32 %v488, %v945
    %v947 = vand.u32 %v946, 4294901760
    %948 = vmatpush1.msra.mxu0 %v947
    %949 = vmatprep.subr.mxu0 0.0
    %v950 = vand.u32 %v489, 4294901760
    %v951 = vsub.f32 %v489, %v950
    %v952 = vand.u32 %v951, 4294901760
    %953 = vmatpush1.msra.mxu0 %v952
    %954 = vmatprep.subr.mxu0 0.0
    %v955 = vand.u32 %v490, 4294901760
    %v956 = vsub.f32 %v490, %v955
    %v957 = vand.u32 %v956, 4294901760
    %958 = vmatpush1.msra.mxu0 %v957
    %959 = vmatprep.subr.mxu0 0.0
    %v960 = vand.u32 %v491, 4294901760
    %v961 = vsub.f32 %v491, %v960
    %v962 = vand.u32 %v961, 4294901760
    %963 = vmatpush1.msra.mxu0 %v962
    %964 = vmatprep.subr.mxu0 0.0
    %v965 = vand.u32 %v492, 4294901760
    %v966 = vsub.f32 %v492, %v965
    %v967 = vand.u32 %v966, 4294901760
    %968 = vmatpush1.msra.mxu0 %v967
    %969 = vmatprep.subr.mxu0 0.0
    %v970 = vand.u32 %v493, 4294901760
    %v971 = vsub.f32 %v493, %v970
    %v972 = vand.u32 %v971, 4294901760
    %973 = vmatpush1.msra.mxu0 %v972
    %974 = vmatprep.subr.mxu0 0.0
    %v975 = vand.u32 %v494, 4294901760
    %v976 = vsub.f32 %v494, %v975
    %v977 = vand.u32 %v976, 4294901760
    %978 = vmatpush1.msra.mxu0 %v977
    %979 = vmatprep.subr.mxu0 0.0
    %v980 = vand.u32 %v495, 4294901760
    %v981 = vsub.f32 %v495, %v980
    %v982 = vand.u32 %v981, 4294901760
    %983 = vmatpush1.msra.mxu0 %v982
    %984 = vmatprep.subr.mxu0 0.0
    %v985 = vand.u32 %v496, 4294901760
    %v986 = vsub.f32 %v496, %v985
    %v987 = vand.u32 %v986, 4294901760
    %988 = vmatpush1.msra.mxu0 %v987
    %989 = vmatprep.subr.mxu0 0.0
    %v990 = vand.u32 %v497, 4294901760
    %v991 = vsub.f32 %v497, %v990
    %v992 = vand.u32 %v991, 4294901760
    %993 = vmatpush1.msra.mxu0 %v992
    %994 = vmatprep.subr.mxu0 0.0
    %v995 = vand.u32 %v498, 4294901760
    %v996 = vsub.f32 %v498, %v995
    %v997 = vand.u32 %v996, 4294901760
    %998 = vmatpush1.msra.mxu0 %v997
    %999 = vmatprep.subr.mxu0 0.0
    %v1000 = vand.u32 %v499, 4294901760
    %v1001 = vsub.f32 %v499, %v1000
    %v1002 = vand.u32 %v1001, 4294901760
    %1003 = vmatpush1.msra.mxu0 %v1002
    %1004 = vmatprep.subr.mxu0 0.0
    %v1005 = vand.u32 %v500, 4294901760
    %v1006 = vsub.f32 %v500, %v1005
    %v1007 = vand.u32 %v1006, 4294901760
    %1008 = vmatpush1.msra.mxu0 %v1007
    %1009 = vmatprep.subr.mxu0 0.0
    %v1010 = vand.u32 %v501, 4294901760
    %v1011 = vsub.f32 %v501, %v1010
    %v1012 = vand.u32 %v1011, 4294901760
    %1013 = vmatpush1.msra.mxu0 %v1012
    %1014 = vmatprep.subr.mxu0 0.0
    %v1015 = vand.u32 %v502, 4294901760
    %v1016 = vsub.f32 %v502, %v1015
    %v1017 = vand.u32 %v1016, 4294901760
    %1018 = vmatpush1.msra.mxu0 %v1017
    %1019 = vmatprep.subr.mxu0 0.0
    %v1020 = vand.u32 %v503, 4294901760
    %v1021 = vsub.f32 %v503, %v1020
    %v1022 = vand.u32 %v1021, 4294901760
    %1023 = vmatpush1.msra.mxu0 %v1022
    %1024 = vmatprep.subr.mxu0 0.0
    %1025 = vmatpush1.msra.mxu0 0.0
    %1026 = vmatprep.subr.mxu0 0.0
    %1027 = vmatpush1.msra.mxu0 0.0
    %1028 = vmatprep.subr.mxu0 0.0
    %1029 = vmatpush1.msra.mxu0 0.0
    %1030 = vmatprep.subr.mxu0 0.0
    %1031 = vmatpush1.msra.mxu0 0.0
    %1032 = vmatprep.subr.mxu0 0.0
    %1033 = vmatpush1.msra.mxu0 0.0
    %1034 = vmatprep.subr.mxu0 0.0
    %1035 = vmatpush1.msra.mxu0 0.0
    %1036 = vmatprep.subr.mxu0 0.0
    %1037 = vmatpush1.msra.mxu0 0.0
    %1038 = vmatprep.subr.mxu0 0.0
    %1039 = vmatpush1.msra.mxu0 0.0
    %1040 = vmatprep.subr.mxu0 0.0
    %1041 = vmatpush1.msra.mxu0 0.0
    %1042 = vmatprep.subr.mxu0 0.0
    %1043 = vmatpush1.msra.mxu0 0.0
    %1044 = vmatprep.subr.mxu0 0.0
    %1045 = vmatpush1.msra.mxu0 0.0
    %1046 = vmatprep.subr.mxu0 0.0
    %1047 = vmatpush1.msra.mxu0 0.0
    %1048 = vmatprep.subr.mxu0 0.0
    %1049 = vmatpush1.msra.mxu0 0.0
    %1050 = vmatprep.subr.mxu0 0.0
    %1051 = vmatpush1.msra.mxu0 0.0
    %1052 = vmatprep.subr.mxu0 0.0
    %1053 = vmatpush1.msra.mxu0 0.0
    %1054 = vmatprep.subr.mxu0 0.0
    %1055 = vmatpush1.msra.mxu0 0.0
    %1056 = vmatprep.mubr.f32.mxu0 0.0
    %v1057 = vand.u32 %v487, 4294901760
    %1058 = vmatmul.mubr.f32.gmra.mrb[0].mxu0 %v1057
    %v1059 = vpop.f32.mrb[0].mxu0
    %v1060 = vadd.f32 %v941, %v1059
    %v1061 = vpop.f32.mrb[0].mxu0
    %1062 = vdwg.mxu0
    %1063 = vmatprep.subr.mxu0 0.0
    %v1064 = vand.u32 %v488, 4294901760
    %1065 = vmatpush1.msra.mxu0 %v1064
    %1066 = vmatprep.subr.mxu0 0.0
    %v1067 = vand.u32 %v489, 4294901760
    %1068 = vmatpush1.msra.mxu0 %v1067
    %1069 = vmatprep.subr.mxu0 0.0
    %v1070 = vand.u32 %v490, 4294901760
    %1071 = vmatpush1.msra.mxu0 %v1070
    %1072 = vmatprep.subr.mxu0 0.0
    %v1073 = vand.u32 %v491, 4294901760
    %1074 = vmatpush1.msra.mxu0 %v1073
    %1075 = vmatprep.subr.mxu0 0.0
    %v1076 = vand.u32 %v492, 4294901760
    %1077 = vmatpush1.msra.mxu0 %v1076
    %1078 = vmatprep.subr.mxu0 0.0
    %v1079 = vand.u32 %v493, 4294901760
    %1080 = vmatpush1.msra.mxu0 %v1079
    %1081 = vmatprep.subr.mxu0 0.0
    %v1082 = vand.u32 %v494, 4294901760
    %1083 = vmatpush1.msra.mxu0 %v1082
    %1084 = vmatprep.subr.mxu0 0.0
    %v1085 = vand.u32 %v495, 4294901760
    %1086 = vmatpush1.msra.mxu0 %v1085
    %1087 = vmatprep.subr.mxu0 0.0
    %v1088 = vand.u32 %v496, 4294901760
    %1089 = vmatpush1.msra.mxu0 %v1088
    %1090 = vmatprep.subr.mxu0 0.0
    %v1091 = vand.u32 %v497, 4294901760
    %1092 = vmatpush1.msra.mxu0 %v1091
    %1093 = vmatprep.subr.mxu0 0.0
    %v1094 = vand.u32 %v498, 4294901760
    %1095 = vmatpush1.msra.mxu0 %v1094
    %1096 = vmatprep.subr.mxu0 0.0
    %v1097 = vand.u32 %v499, 4294901760
    %1098 = vmatpush1.msra.mxu0 %v1097
    %1099 = vmatprep.subr.mxu0 0.0
    %v1100 = vand.u32 %v500, 4294901760
    %1101 = vmatpush1.msra.mxu0 %v1100
    %1102 = vmatprep.subr.mxu0 0.0
    %v1103 = vand.u32 %v501, 4294901760
    %1104 = vmatpush1.msra.mxu0 %v1103
    %1105 = vmatprep.subr.mxu0 0.0
    %v1106 = vand.u32 %v502, 4294901760
    %1107 = vmatpush1.msra.mxu0 %v1106
    %1108 = vmatprep.subr.mxu0 0.0
    %v1109 = vand.u32 %v503, 4294901760
    %1110 = vmatpush1.msra.mxu0 %v1109
    %1111 = vmatprep.subr.mxu0 0.0
    %1112 = vmatpush1.msra.mxu0 0.0
    %1113 = vmatprep.subr.mxu0 0.0
    %1114 = vmatpush1.msra.mxu0 0.0
    %1115 = vmatprep.subr.mxu0 0.0
    %1116 = vmatpush1.msra.mxu0 0.0
    %1117 = vmatprep.subr.mxu0 0.0
    %1118 = vmatpush1.msra.mxu0 0.0
    %1119 = vmatprep.subr.mxu0 0.0
    %1120 = vmatpush1.msra.mxu0 0.0
    %1121 = vmatprep.subr.mxu0 0.0
    %1122 = vmatpush1.msra.mxu0 0.0
    %1123 = vmatprep.subr.mxu0 0.0
    %1124 = vmatpush1.msra.mxu0 0.0
    %1125 = vmatprep.subr.mxu0 0.0
    %1126 = vmatpush1.msra.mxu0 0.0
    %1127 = vmatprep.subr.mxu0 0.0
    %1128 = vmatpush1.msra.mxu0 0.0
    %1129 = vmatprep.subr.mxu0 0.0
    %1130 = vmatpush1.msra.mxu0 0.0
    %1131 = vmatprep.subr.mxu0 0.0
    %1132 = vmatpush1.msra.mxu0 0.0
    %1133 = vmatprep.subr.mxu0 0.0
    %1134 = vmatpush1.msra.mxu0 0.0
    %1135 = vmatprep.subr.mxu0 0.0
    %1136 = vmatpush1.msra.mxu0 0.0
    %1137 = vmatprep.subr.mxu0 0.0
    %1138 = vmatpush1.msra.mxu0 0.0
    %1139 = vmatprep.subr.mxu0 0.0
    %1140 = vmatpush1.msra.mxu0 0.0
    %1141 = vmatprep.subr.mxu0 0.0
    %1142 = vmatpush1.msra.mxu0 0.0
    %1143 = vmatprep.mubr.f32.mxu0 0.0
    %v1144 = vand.u32 %v487, 4294901760
    %1145 = vmatmul.mubr.f32.gmra.mrb[0].mxu0 %v1144
    %v1146 = vpop.f32.mrb[0].mxu0
    %v1147 = vadd.f32 %v1060, %v1146
    %v1148 = vpop.f32.mrb[0].mxu0
    %1149 = vdwg.mxu0
    %v1150 = vmax.f32 %v1147, 0.0
    %v1151 = vld [vmem:[#allocation2 + $0x20] sm:$0xff]
    %v1152 = vld [vmem:[#allocation2 + $0x28] sm:$0xff]
    %v1153 = vld [vmem:[#allocation2 + $0x30] sm:$0xff]
    %v1154 = vld [vmem:[#allocation2 + $0x38] sm:$0xff]
    %v1155 = vld [vmem:[#allocation2 + $0x40] sm:$0xff]
    %v1156 = vld [vmem:[#allocation2 + $0x48] sm:$0xff]
    %v1157 = vld [vmem:[#allocation2 + $0x50] sm:$0xff]
    %v1158 = vld [vmem:[#allocation2 + $0x58] sm:$0xff]
    %v1159 = vld [vmem:[#allocation2 + $0x60] sm:$0xff]
    %v1160 = vld [vmem:[#allocation2 + $0x68] sm:$0xff]
    %v1161 = vld [vmem:[#allocation2 + $0x70] sm:$0xff]
    %v1162 = vld [vmem:[#allocation2 + $0x78] sm:$0xff]
    %v1163 = vld [vmem:[#allocation2 + $0x80] sm:$0xff]
    %v1164 = vld [vmem:[#allocation2 + $0x88] sm:$0xff]
    %v1165 = vld [vmem:[#allocation2 + $0x90] sm:$0xff]
    %v1166 = vld [vmem:[#allocation2 + $0x98] sm:$0xff]
    %v1167 = vld [vmem:[#allocation2 + $0x98] sm:$0x1]
    %v1168 = vlaneseq
    %v1169 = vshrl.u32 %v1168, 7
    %v1170 = vsub.s32 0, %v1169
    %v1171 = vrot.slane %v1167, %v1170
    %1172 = vmatprep.subr.mxu0 0.0
    %v1173 = vand.u32 %v1151, 4294901760
    %1174 = vmatpush1.msra.mxu0 %v1173
    %1175 = vmatprep.subr.mxu0 0.0
    %v1176 = vand.u32 %v1152, 4294901760
    %1177 = vmatpush1.msra.mxu0 %v1176
    %1178 = vmatprep.subr.mxu0 0.0
    %v1179 = vand.u32 %v1153, 4294901760
    %1180 = vmatpush1.msra.mxu0 %v1179
    %1181 = vmatprep.subr.mxu0 0.0
    %v1182 = vand.u32 %v1154, 4294901760
    %1183 = vmatpush1.msra.mxu0 %v1182
    %1184 = vmatprep.subr.mxu0 0.0
    %v1185 = vand.u32 %v1155, 4294901760
    %1186 = vmatpush1.msra.mxu0 %v1185
    %1187 = vmatprep.subr.mxu0 0.0
    %v1188 = vand.u32 %v1156, 4294901760
    %1189 = vmatpush1.msra.mxu0 %v1188
    %1190 = vmatprep.subr.mxu0 0.0
    %v1191 = vand.u32 %v1157, 4294901760
    %1192 = vmatpush1.msra.mxu0 %v1191
    %1193 = vmatprep.subr.mxu0 0.0
    %v1194 = vand.u32 %v1158, 4294901760
    %1195 = vmatpush1.msra.mxu0 %v1194
    %1196 = vmatprep.subr.mxu0 0.0
    %v1197 = vand.u32 %v1159, 4294901760
    %1198 = vmatpush1.msra.mxu0 %v1197
    %1199 = vmatprep.subr.mxu0 0.0
    %v1200 = vand.u32 %v1160, 4294901760
    %1201 = vmatpush1.msra.mxu0 %v1200
    %1202 = vmatprep.subr.mxu0 0.0
    %v1203 = vand.u32 %v1161, 4294901760
    %1204 = vmatpush1.msra.mxu0 %v1203
    %1205 = vmatprep.subr.mxu0 0.0
    %v1206 = vand.u32 %v1162, 4294901760
    %1207 = vmatpush1.msra.mxu0 %v1206
    %1208 = vmatprep.subr.mxu0 0.0
    %v1209 = vand.u32 %v1163, 4294901760
    %1210 = vmatpush1.msra.mxu0 %v1209
    %1211 = vmatprep.subr.mxu0 0.0
    %v1212 = vand.u32 %v1164, 4294901760
    %1213 = vmatpush1.msra.mxu0 %v1212
    %1214 = vmatprep.subr.mxu0 0.0
    %v1215 = vand.u32 %v1165, 4294901760
    %1216 = vmatpush1.msra.mxu0 %v1215
    %1217 = vmatprep.subr.mxu0 0.0
    %v1218 = vand.u32 %v1166, 4294901760
    %1219 = vmatpush1.msra.mxu0 %v1218
    %1220 = vmatprep.subr.mxu0 0.0
    %1221 = vmatpush1.msra.mxu0 0.0
    %1222 = vmatprep.subr.mxu0 0.0
    %1223 = vmatpush1.msra.mxu0 0.0
    %1224 = vmatprep.subr.mxu0 0.0
    %1225 = vmatpush1.msra.mxu0 0.0
    %1226 = vmatprep.subr.mxu0 0.0
    %1227 = vmatpush1.msra.mxu0 0.0
    %1228 = vmatprep.subr.mxu0 0.0
    %1229 = vmatpush1.msra.mxu0 0.0
    %1230 = vmatprep.subr.mxu0 0.0
    %1231 = vmatpush1.msra.mxu0 0.0
    %1232 = vmatprep.subr.mxu0 0.0
    %1233 = vmatpush1.msra.mxu0 0.0
    %1234 = vmatprep.subr.mxu0 0.0
    %1235 = vmatpush1.msra.mxu0 0.0
    %1236 = vmatprep.subr.mxu0 0.0
    %1237 = vmatpush1.msra.mxu0 0.0
    %1238 = vmatprep.subr.mxu0 0.0
    %1239 = vmatpush1.msra.mxu0 0.0
    %1240 = vmatprep.subr.mxu0 0.0
    %1241 = vmatpush1.msra.mxu0 0.0
    %1242 = vmatprep.subr.mxu0 0.0
    %1243 = vmatpush1.msra.mxu0 0.0
    %1244 = vmatprep.subr.mxu0 0.0
    %1245 = vmatpush1.msra.mxu0 0.0
    %1246 = vmatprep.subr.mxu0 0.0
    %1247 = vmatpush1.msra.mxu0 0.0
    %1248 = vmatprep.subr.mxu0 0.0
    %1249 = vmatpush1.msra.mxu0 0.0
    %1250 = vmatprep.subr.mxu0 0.0
    %1251 = vmatpush1.msra.mxu0 0.0
    %1252 = vmatprep.mubr.f32.mxu0 0.0
    %v1253 = vand.u32 %v1150, 4294901760
    %v1254 = vsub.f32 %v1150, %v1253
    %v1255 = vand.u32 %v1254, 4294901760
    %v1256 = vsub.f32 %v1254, %v1255
    %v1257 = vand.u32 %v1256, 4294901760
    %1258 = vmatmul.mubr.f32.gmra.mrb[0].mxu0 %v1257
    %v1259 = vpop.f32.mrb[0].mxu0
    %v1260 = vadd.f32 %v1171, %v1259
    %v1261 = vpop.f32.mrb[0].mxu0
    %1262 = vdwg.mxu0
    %1263 = vmatprep.subr.mxu0 0.0
    %v1264 = vand.u32 %v1151, 4294901760
    %v1265 = vsub.f32 %v1151, %v1264
    %v1266 = vand.u32 %v1265, 4294901760
    %v1267 = vsub.f32 %v1265, %v1266
    %v1268 = vand.u32 %v1267, 4294901760
    %1269 = vmatpush1.msra.mxu0 %v1268
    %1270 = vmatprep.subr.mxu0 0.0
    %v1271 = vand.u32 %v1152, 4294901760
    %v1272 = vsub.f32 %v1152, %v1271
    %v1273 = vand.u32 %v1272, 4294901760
    %v1274 = vsub.f32 %v1272, %v1273
    %v1275 = vand.u32 %v1274, 4294901760
    %1276 = vmatpush1.msra.mxu0 %v1275
    %1277 = vmatprep.subr.mxu0 0.0
    %v1278 = vand.u32 %v1153, 4294901760
    %v1279 = vsub.f32 %v1153, %v1278
    %v1280 = vand.u32 %v1279, 4294901760
    %v1281 = vsub.f32 %v1279, %v1280
    %v1282 = vand.u32 %v1281, 4294901760
    %1283 = vmatpush1.msra.mxu0 %v1282
    %1284 = vmatprep.subr.mxu0 0.0
    %v1285 = vand.u32 %v1154, 4294901760
    %v1286 = vsub.f32 %v1154, %v1285
    %v1287 = vand.u32 %v1286, 4294901760
    %v1288 = vsub.f32 %v1286, %v1287
    %v1289 = vand.u32 %v1288, 4294901760
    %1290 = vmatpush1.msra.mxu0 %v1289
    %1291 = vmatprep.subr.mxu0 0.0
    %v1292 = vand.u32 %v1155, 4294901760
    %v1293 = vsub.f32 %v1155, %v1292
    %v1294 = vand.u32 %v1293, 4294901760
    %v1295 = vsub.f32 %v1293, %v1294
    %v1296 = vand.u32 %v1295, 4294901760
    %1297 = vmatpush1.msra.mxu0 %v1296
    %1298 = vmatprep.subr.mxu0 0.0
    %v1299 = vand.u32 %v1156, 4294901760
    %v1300 = vsub.f32 %v1156, %v1299
    %v1301 = vand.u32 %v1300, 4294901760
    %v1302 = vsub.f32 %v1300, %v1301
    %v1303 = vand.u32 %v1302, 4294901760
    %1304 = vmatpush1.msra.mxu0 %v1303
    %1305 = vmatprep.subr.mxu0 0.0
    %v1306 = vand.u32 %v1157, 4294901760
    %v1307 = vsub.f32 %v1157, %v1306
    %v1308 = vand.u32 %v1307, 4294901760
    %v1309 = vsub.f32 %v1307, %v1308
    %v1310 = vand.u32 %v1309, 4294901760
    %1311 = vmatpush1.msra.mxu0 %v1310
    %1312 = vmatprep.subr.mxu0 0.0
    %v1313 = vand.u32 %v1158, 4294901760
    %v1314 = vsub.f32 %v1158, %v1313
    %v1315 = vand.u32 %v1314, 4294901760
    %v1316 = vsub.f32 %v1314, %v1315
    %v1317 = vand.u32 %v1316, 4294901760
    %1318 = vmatpush1.msra.mxu0 %v1317
    %1319 = vmatprep.subr.mxu0 0.0
    %v1320 = vand.u32 %v1159, 4294901760
    %v1321 = vsub.f32 %v1159, %v1320
    %v1322 = vand.u32 %v1321, 4294901760
    %v1323 = vsub.f32 %v1321, %v1322
    %v1324 = vand.u32 %v1323, 4294901760
    %1325 = vmatpush1.msra.mxu0 %v1324
    %1326 = vmatprep.subr.mxu0 0.0
    %v1327 = vand.u32 %v1160, 4294901760
    %v1328 = vsub.f32 %v1160, %v1327
    %v1329 = vand.u32 %v1328, 4294901760
    %v1330 = vsub.f32 %v1328, %v1329
    %v1331 = vand.u32 %v1330, 4294901760
    %1332 = vmatpush1.msra.mxu0 %v1331
    %1333 = vmatprep.subr.mxu0 0.0
    %v1334 = vand.u32 %v1161, 4294901760
    %v1335 = vsub.f32 %v1161, %v1334
    %v1336 = vand.u32 %v1335, 4294901760
    %v1337 = vsub.f32 %v1335, %v1336
    %v1338 = vand.u32 %v1337, 4294901760
    %1339 = vmatpush1.msra.mxu0 %v1338
    %1340 = vmatprep.subr.mxu0 0.0
    %v1341 = vand.u32 %v1162, 4294901760
    %v1342 = vsub.f32 %v1162, %v1341
    %v1343 = vand.u32 %v1342, 4294901760
    %v1344 = vsub.f32 %v1342, %v1343
    %v1345 = vand.u32 %v1344, 4294901760
    %1346 = vmatpush1.msra.mxu0 %v1345
    %1347 = vmatprep.subr.mxu0 0.0
    %v1348 = vand.u32 %v1163, 4294901760
    %v1349 = vsub.f32 %v1163, %v1348
    %v1350 = vand.u32 %v1349, 4294901760
    %v1351 = vsub.f32 %v1349, %v1350
    %v1352 = vand.u32 %v1351, 4294901760
    %1353 = vmatpush1.msra.mxu0 %v1352
    %1354 = vmatprep.subr.mxu0 0.0
    %v1355 = vand.u32 %v1164, 4294901760
    %v1356 = vsub.f32 %v1164, %v1355
    %v1357 = vand.u32 %v1356, 4294901760
    %v1358 = vsub.f32 %v1356, %v1357
    %v1359 = vand.u32 %v1358, 4294901760
    %1360 = vmatpush1.msra.mxu0 %v1359
    %1361 = vmatprep.subr.mxu0 0.0
    %v1362 = vand.u32 %v1165, 4294901760
    %v1363 = vsub.f32 %v1165, %v1362
    %v1364 = vand.u32 %v1363, 4294901760
    %v1365 = vsub.f32 %v1363, %v1364
    %v1366 = vand.u32 %v1365, 4294901760
    %1367 = vmatpush1.msra.mxu0 %v1366
    %1368 = vmatprep.subr.mxu0 0.0
    %v1369 = vand.u32 %v1166, 4294901760
    %v1370 = vsub.f32 %v1166, %v1369
    %v1371 = vand.u32 %v1370, 4294901760
    %v1372 = vsub.f32 %v1370, %v1371
    %v1373 = vand.u32 %v1372, 4294901760
    %1374 = vmatpush1.msra.mxu0 %v1373
    %1375 = vmatprep.subr.mxu0 0.0
    %1376 = vmatpush1.msra.mxu0 0.0
    %1377 = vmatprep.subr.mxu0 0.0
    %1378 = vmatpush1.msra.mxu0 0.0
    %1379 = vmatprep.subr.mxu0 0.0
    %1380 = vmatpush1.msra.mxu0 0.0
    %1381 = vmatprep.subr.mxu0 0.0
    %1382 = vmatpush1.msra.mxu0 0.0
    %1383 = vmatprep.subr.mxu0 0.0
    %1384 = vmatpush1.msra.mxu0 0.0
    %1385 = vmatprep.subr.mxu0 0.0
    %1386 = vmatpush1.msra.mxu0 0.0
    %1387 = vmatprep.subr.mxu0 0.0
    %1388 = vmatpush1.msra.mxu0 0.0
    %1389 = vmatprep.subr.mxu0 0.0
    %1390 = vmatpush1.msra.mxu0 0.0
    %1391 = vmatprep.subr.mxu0 0.0
    %1392 = vmatpush1.msra.mxu0 0.0
    %1393 = vmatprep.subr.mxu0 0.0
    %1394 = vmatpush1.msra.mxu0 0.0
    %1395 = vmatprep.subr.mxu0 0.0
    %1396 = vmatpush1.msra.mxu0 0.0
    %1397 = vmatprep.subr.mxu0 0.0
    %1398 = vmatpush1.msra.mxu0 0.0
    %1399 = vmatprep.subr.mxu0 0.0
    %1400 = vmatpush1.msra.mxu0 0.0
    %1401 = vmatprep.subr.mxu0 0.0
    %1402 = vmatpush1.msra.mxu0 0.0
    %1403 = vmatprep.subr.mxu0 0.0
    %1404 = vmatpush1.msra.mxu0 0.0
    %1405 = vmatprep.subr.mxu0 0.0
    %1406 = vmatpush1.msra.mxu0 0.0
    %1407 = vmatprep.mubr.f32.mxu0 0.0
    %v1408 = vand.u32 %v1150, 4294901760
    %1409 = vmatmul.mubr.f32.gmra.mrb[0].mxu0 %v1408
    %v1410 = vpop.f32.mrb[0].mxu0
    %v1411 = vadd.f32 %v1260, %v1410
    %v1412 = vpop.f32.mrb[0].mxu0
    %1413 = vdwg.mxu0
    %1414 = vmatprep.subr.mxu0 0.0
    %v1415 = vand.u32 %v1151, 4294901760
    %v1416 = vsub.f32 %v1151, %v1415
    %1417 = vmatpush1.msra.mxu0 %v1416
    %1418 = vmatprep.subr.mxu0 0.0
    %v1419 = vand.u32 %v1152, 4294901760
    %v1420 = vsub.f32 %v1152, %v1419
    %1421 = vmatpush1.msra.mxu0 %v1420
    %1422 = vmatprep.subr.mxu0 0.0
    %v1423 = vand.u32 %v1153, 4294901760
    %v1424 = vsub.f32 %v1153, %v1423
    %1425 = vmatpush1.msra.mxu0 %v1424
    %1426 = vmatprep.subr.mxu0 0.0
    %v1427 = vand.u32 %v1154, 4294901760
    %v1428 = vsub.f32 %v1154, %v1427
    %1429 = vmatpush1.msra.mxu0 %v1428
    %1430 = vmatprep.subr.mxu0 0.0
    %v1431 = vand.u32 %v1155, 4294901760
    %v1432 = vsub.f32 %v1155, %v1431
    %1433 = vmatpush1.msra.mxu0 %v1432
    %1434 = vmatprep.subr.mxu0 0.0
    %v1435 = vand.u32 %v1156, 4294901760
    %v1436 = vsub.f32 %v1156, %v1435
    %1437 = vmatpush1.msra.mxu0 %v1436
    %1438 = vmatprep.subr.mxu0 0.0
    %v1439 = vand.u32 %v1157, 4294901760
    %v1440 = vsub.f32 %v1157, %v1439
    %1441 = vmatpush1.msra.mxu0 %v1440
    %1442 = vmatprep.subr.mxu0 0.0
    %v1443 = vand.u32 %v1158, 4294901760
    %v1444 = vsub.f32 %v1158, %v1443
    %1445 = vmatpush1.msra.mxu0 %v1444
    %1446 = vmatprep.subr.mxu0 0.0
    %v1447 = vand.u32 %v1159, 4294901760
    %v1448 = vsub.f32 %v1159, %v1447
    %1449 = vmatpush1.msra.mxu0 %v1448
    %1450 = vmatprep.subr.mxu0 0.0
    %v1451 = vand.u32 %v1160, 4294901760
    %v1452 = vsub.f32 %v1160, %v1451
    %1453 = vmatpush1.msra.mxu0 %v1452
    %1454 = vmatprep.subr.mxu0 0.0
    %v1455 = vand.u32 %v1161, 4294901760
    %v1456 = vsub.f32 %v1161, %v1455
    %1457 = vmatpush1.msra.mxu0 %v1456
    %1458 = vmatprep.subr.mxu0 0.0
    %v1459 = vand.u32 %v1162, 4294901760
    %v1460 = vsub.f32 %v1162, %v1459
    %1461 = vmatpush1.msra.mxu0 %v1460
    %1462 = vmatprep.subr.mxu0 0.0
    %v1463 = vand.u32 %v1163, 4294901760
    %v1464 = vsub.f32 %v1163, %v1463
    %1465 = vmatpush1.msra.mxu0 %v1464
    %1466 = vmatprep.subr.mxu0 0.0
    %v1467 = vand.u32 %v1164, 4294901760
    %v1468 = vsub.f32 %v1164, %v1467
    %1469 = vmatpush1.msra.mxu0 %v1468
    %1470 = vmatprep.subr.mxu0 0.0
    %v1471 = vand.u32 %v1165, 4294901760
    %v1472 = vsub.f32 %v1165, %v1471
    %1473 = vmatpush1.msra.mxu0 %v1472
    %1474 = vmatprep.subr.mxu0 0.0
    %v1475 = vand.u32 %v1166, 4294901760
    %v1476 = vsub.f32 %v1166, %v1475
    %1477 = vmatpush1.msra.mxu0 %v1476
    %1478 = vmatprep.subr.mxu0 0.0
    %1479 = vmatpush1.msra.mxu0 0.0
    %1480 = vmatprep.subr.mxu0 0.0
    %1481 = vmatpush1.msra.mxu0 0.0
    %1482 = vmatprep.subr.mxu0 0.0
    %1483 = vmatpush1.msra.mxu0 0.0
    %1484 = vmatprep.subr.mxu0 0.0
    %1485 = vmatpush1.msra.mxu0 0.0
    %1486 = vmatprep.subr.mxu0 0.0
    %1487 = vmatpush1.msra.mxu0 0.0
    %1488 = vmatprep.subr.mxu0 0.0
    %1489 = vmatpush1.msra.mxu0 0.0
    %1490 = vmatprep.subr.mxu0 0.0
    %1491 = vmatpush1.msra.mxu0 0.0
    %1492 = vmatprep.subr.mxu0 0.0
    %1493 = vmatpush1.msra.mxu0 0.0
    %1494 = vmatprep.subr.mxu0 0.0
    %1495 = vmatpush1.msra.mxu0 0.0
    %1496 = vmatprep.subr.mxu0 0.0
    %1497 = vmatpush1.msra.mxu0 0.0
    %1498 = vmatprep.subr.mxu0 0.0
    %1499 = vmatpush1.msra.mxu0 0.0
    %1500 = vmatprep.subr.mxu0 0.0
    %1501 = vmatpush1.msra.mxu0 0.0
    %1502 = vmatprep.subr.mxu0 0.0
    %1503 = vmatpush1.msra.mxu0 0.0
    %1504 = vmatprep.subr.mxu0 0.0
    %1505 = vmatpush1.msra.mxu0 0.0
    %1506 = vmatprep.subr.mxu0 0.0
    %1507 = vmatpush1.msra.mxu0 0.0
    %1508 = vmatprep.subr.mxu0 0.0
    %1509 = vmatpush1.msra.mxu0 0.0
    %1510 = vmatprep.mubr.f32.mxu0 0.0
    %v1511 = vand.u32 %v1150, 4294901760
    %v1512 = vsub.f32 %v1150, %v1511
    %1513 = vmatmul.mubr.f32.gmra.mrb[0].mxu0 %v1512
    %v1514 = vpop.f32.mrb[0].mxu0
    %v1515 = vadd.f32 %v1411, %v1514
    %v1516 = vpop.f32.mrb[0].mxu0
    %1517 = vdwg.mxu0
    %1518 = vmatprep.subr.mxu0 0.0
    %v1519 = vand.u32 %v1151, 4294901760
    %1520 = vmatpush1.msra.mxu0 %v1519
    %1521 = vmatprep.subr.mxu0 0.0
    %v1522 = vand.u32 %v1152, 4294901760
    %1523 = vmatpush1.msra.mxu0 %v1522
    %1524 = vmatprep.subr.mxu0 0.0
    %v1525 = vand.u32 %v1153, 4294901760
    %1526 = vmatpush1.msra.mxu0 %v1525
    %1527 = vmatprep.subr.mxu0 0.0
    %v1528 = vand.u32 %v1154, 4294901760
    %1529 = vmatpush1.msra.mxu0 %v1528
    %1530 = vmatprep.subr.mxu0 0.0
    %v1531 = vand.u32 %v1155, 4294901760
    %1532 = vmatpush1.msra.mxu0 %v1531
    %1533 = vmatprep.subr.mxu0 0.0
    %v1534 = vand.u32 %v1156, 4294901760
    %1535 = vmatpush1.msra.mxu0 %v1534
    %1536 = vmatprep.subr.mxu0 0.0
    %v1537 = vand.u32 %v1157, 4294901760
    %1538 = vmatpush1.msra.mxu0 %v1537
    %1539 = vmatprep.subr.mxu0 0.0
    %v1540 = vand.u32 %v1158, 4294901760
    %1541 = vmatpush1.msra.mxu0 %v1540
    %1542 = vmatprep.subr.mxu0 0.0
    %v1543 = vand.u32 %v1159, 4294901760
    %1544 = vmatpush1.msra.mxu0 %v1543
    %1545 = vmatprep.subr.mxu0 0.0
    %v1546 = vand.u32 %v1160, 4294901760
    %1547 = vmatpush1.msra.mxu0 %v1546
    %1548 = vmatprep.subr.mxu0 0.0
    %v1549 = vand.u32 %v1161, 4294901760
    %1550 = vmatpush1.msra.mxu0 %v1549
    %1551 = vmatprep.subr.mxu0 0.0
    %v1552 = vand.u32 %v1162, 4294901760
    %1553 = vmatpush1.msra.mxu0 %v1552
    %1554 = vmatprep.subr.mxu0 0.0
    %v1555 = vand.u32 %v1163, 4294901760
    %1556 = vmatpush1.msra.mxu0 %v1555
    %1557 = vmatprep.subr.mxu0 0.0
    %v1558 = vand.u32 %v1164, 4294901760
    %1559 = vmatpush1.msra.mxu0 %v1558
    %1560 = vmatprep.subr.mxu0 0.0
    %v1561 = vand.u32 %v1165, 4294901760
    %1562 = vmatpush1.msra.mxu0 %v1561
    %1563 = vmatprep.subr.mxu0 0.0
    %v1564 = vand.u32 %v1166, 4294901760
    %1565 = vmatpush1.msra.mxu0 %v1564
    %1566 = vmatprep.subr.mxu0 0.0
    %1567 = vmatpush1.msra.mxu0 0.0
    %1568 = vmatprep.subr.mxu0 0.0
    %1569 = vmatpush1.msra.mxu0 0.0
    %1570 = vmatprep.subr.mxu0 0.0
    %1571 = vmatpush1.msra.mxu0 0.0
    %1572 = vmatprep.subr.mxu0 0.0
    %1573 = vmatpush1.msra.mxu0 0.0
    %1574 = vmatprep.subr.mxu0 0.0
    %1575 = vmatpush1.msra.mxu0 0.0
    %1576 = vmatprep.subr.mxu0 0.0
    %1577 = vmatpush1.msra.mxu0 0.0
    %1578 = vmatprep.subr.mxu0 0.0
    %1579 = vmatpush1.msra.mxu0 0.0
    %1580 = vmatprep.subr.mxu0 0.0
    %1581 = vmatpush1.msra.mxu0 0.0
    %1582 = vmatprep.subr.mxu0 0.0
    %1583 = vmatpush1.msra.mxu0 0.0
    %1584 = vmatprep.subr.mxu0 0.0
    %1585 = vmatpush1.msra.mxu0 0.0
    %1586 = vmatprep.subr.mxu0 0.0
    %1587 = vmatpush1.msra.mxu0 0.0
    %1588 = vmatprep.subr.mxu0 0.0
    %1589 = vmatpush1.msra.mxu0 0.0
    %1590 = vmatprep.subr.mxu0 0.0
    %1591 = vmatpush1.msra.mxu0 0.0
    %1592 = vmatprep.subr.mxu0 0.0
    %1593 = vmatpush1.msra.mxu0 0.0
    %1594 = vmatprep.subr.mxu0 0.0
    %1595 = vmatpush1.msra.mxu0 0.0
    %1596 = vmatprep.subr.mxu0 0.0
    %1597 = vmatpush1.msra.mxu0 0.0
    %1598 = vmatprep.mubr.f32.mxu0 0.0
    %v1599 = vand.u32 %v1150, 4294901760
    %v1600 = vsub.f32 %v1150, %v1599
    %v1601 = vand.u32 %v1600, 4294901760
    %1602 = vmatmul.mubr.f32.gmra.mrb[0].mxu0 %v1601
    %v1603 = vpop.f32.mrb[0].mxu0
    %v1604 = vadd.f32 %v1515, %v1603
    %v1605 = vpop.f32.mrb[0].mxu0
    %1606 = vdwg.mxu0
    %1607 = vmatprep.subr.mxu0 0.0
    %v1608 = vand.u32 %v1151, 4294901760
    %v1609 = vsub.f32 %v1151, %v1608
    %v1610 = vand.u32 %v1609, 4294901760
    %1611 = vmatpush1.msra.mxu0 %v1610
    %1612 = vmatprep.subr.mxu0 0.0
    %v1613 = vand.u32 %v1152, 4294901760
    %v1614 = vsub.f32 %v1152, %v1613
    %v1615 = vand.u32 %v1614, 4294901760
    %1616 = vmatpush1.msra.mxu0 %v1615
    %1617 = vmatprep.subr.mxu0 0.0
    %v1618 = vand.u32 %v1153, 4294901760
    %v1619 = vsub.f32 %v1153, %v1618
    %v1620 = vand.u32 %v1619, 4294901760
    %1621 = vmatpush1.msra.mxu0 %v1620
    %1622 = vmatprep.subr.mxu0 0.0
    %v1623 = vand.u32 %v1154, 4294901760
    %v1624 = vsub.f32 %v1154, %v1623
    %v1625 = vand.u32 %v1624, 4294901760
    %1626 = vmatpush1.msra.mxu0 %v1625
    %1627 = vmatprep.subr.mxu0 0.0
    %v1628 = vand.u32 %v1155, 4294901760
    %v1629 = vsub.f32 %v1155, %v1628
    %v1630 = vand.u32 %v1629, 4294901760
    %1631 = vmatpush1.msra.mxu0 %v1630
    %1632 = vmatprep.subr.mxu0 0.0
    %v1633 = vand.u32 %v1156, 4294901760
    %v1634 = vsub.f32 %v1156, %v1633
    %v1635 = vand.u32 %v1634, 4294901760
    %1636 = vmatpush1.msra.mxu0 %v1635
    %1637 = vmatprep.subr.mxu0 0.0
    %v1638 = vand.u32 %v1157, 4294901760
    %v1639 = vsub.f32 %v1157, %v1638
    %v1640 = vand.u32 %v1639, 4294901760
    %1641 = vmatpush1.msra.mxu0 %v1640
    %1642 = vmatprep.subr.mxu0 0.0
    %v1643 = vand.u32 %v1158, 4294901760
    %v1644 = vsub.f32 %v1158, %v1643
    %v1645 = vand.u32 %v1644, 4294901760
    %1646 = vmatpush1.msra.mxu0 %v1645
    %1647 = vmatprep.subr.mxu0 0.0
    %v1648 = vand.u32 %v1159, 4294901760
    %v1649 = vsub.f32 %v1159, %v1648
    %v1650 = vand.u32 %v1649, 4294901760
    %1651 = vmatpush1.msra.mxu0 %v1650
    %1652 = vmatprep.subr.mxu0 0.0
    %v1653 = vand.u32 %v1160, 4294901760
    %v1654 = vsub.f32 %v1160, %v1653
    %v1655 = vand.u32 %v1654, 4294901760
    %1656 = vmatpush1.msra.mxu0 %v1655
    %1657 = vmatprep.subr.mxu0 0.0
    %v1658 = vand.u32 %v1161, 4294901760
    %v1659 = vsub.f32 %v1161, %v1658
    %v1660 = vand.u32 %v1659, 4294901760
    %1661 = vmatpush1.msra.mxu0 %v1660
    %1662 = vmatprep.subr.mxu0 0.0
    %v1663 = vand.u32 %v1162, 4294901760
    %v1664 = vsub.f32 %v1162, %v1663
    %v1665 = vand.u32 %v1664, 4294901760
    %1666 = vmatpush1.msra.mxu0 %v1665
    %1667 = vmatprep.subr.mxu0 0.0
    %v1668 = vand.u32 %v1163, 4294901760
    %v1669 = vsub.f32 %v1163, %v1668
    %v1670 = vand.u32 %v1669, 4294901760
    %1671 = vmatpush1.msra.mxu0 %v1670
    %1672 = vmatprep.subr.mxu0 0.0
    %v1673 = vand.u32 %v1164, 4294901760
    %v1674 = vsub.f32 %v1164, %v1673
    %v1675 = vand.u32 %v1674, 4294901760
    %1676 = vmatpush1.msra.mxu0 %v1675
    %1677 = vmatprep.subr.mxu0 0.0
    %v1678 = vand.u32 %v1165, 4294901760
    %v1679 = vsub.f32 %v1165, %v1678
    %v1680 = vand.u32 %v1679, 4294901760
    %1681 = vmatpush1.msra.mxu0 %v1680
    %1682 = vmatprep.subr.mxu0 0.0
    %v1683 = vand.u32 %v1166, 4294901760
    %v1684 = vsub.f32 %v1166, %v1683
    %v1685 = vand.u32 %v1684, 4294901760
    %1686 = vmatpush1.msra.mxu0 %v1685
    %1687 = vmatprep.subr.mxu0 0.0
    %1688 = vmatpush1.msra.mxu0 0.0
    %1689 = vmatprep.subr.mxu0 0.0
    %1690 = vmatpush1.msra.mxu0 0.0
    %1691 = vmatprep.subr.mxu0 0.0
    %1692 = vmatpush1.msra.mxu0 0.0
    %1693 = vmatprep.subr.mxu0 0.0
    %1694 = vmatpush1.msra.mxu0 0.0
    %1695 = vmatprep.subr.mxu0 0.0
    %1696 = vmatpush1.msra.mxu0 0.0
    %1697 = vmatprep.subr.mxu0 0.0
    %1698 = vmatpush1.msra.mxu0 0.0
    %1699 = vmatprep.subr.mxu0 0.0
    %1700 = vmatpush1.msra.mxu0 0.0
    %1701 = vmatprep.subr.mxu0 0.0
    %1702 = vmatpush1.msra.mxu0 0.0
    %1703 = vmatprep.subr.mxu0 0.0
    %1704 = vmatpush1.msra.mxu0 0.0
    %1705 = vmatprep.subr.mxu0 0.0
    %1706 = vmatpush1.msra.mxu0 0.0
    %1707 = vmatprep.subr.mxu0 0.0
    %1708 = vmatpush1.msra.mxu0 0.0
    %1709 = vmatprep.subr.mxu0 0.0
    %1710 = vmatpush1.msra.mxu0 0.0
    %1711 = vmatprep.subr.mxu0 0.0
    %1712 = vmatpush1.msra.mxu0 0.0
    %1713 = vmatprep.subr.mxu0 0.0
    %1714 = vmatpush1.msra.mxu0 0.0
    %1715 = vmatprep.subr.mxu0 0.0
    %1716 = vmatpush1.msra.mxu0 0.0
    %1717 = vmatprep.subr.mxu0 0.0
    %1718 = vmatpush1.msra.mxu0 0.0
    %1719 = vmatprep.mubr.f32.mxu0 0.0
    %v1720 = vand.u32 %v1150, 4294901760
    %1721 = vmatmul.mubr.f32.gmra.mrb[0].mxu0 %v1720
    %v1722 = vpop.f32.mrb[0].mxu0
    %v1723 = vadd.f32 %v1604, %v1722
    %v1724 = vpop.f32.mrb[0].mxu0
    %1725 = vdwg.mxu0
    %1726 = vmatprep.subr.mxu0 0.0
    %v1727 = vand.u32 %v1151, 4294901760
    %1728 = vmatpush1.msra.mxu0 %v1727
    %1729 = vmatprep.subr.mxu0 0.0
    %v1730 = vand.u32 %v1152, 4294901760
    %1731 = vmatpush1.msra.mxu0 %v1730
    %1732 = vmatprep.subr.mxu0 0.0
    %v1733 = vand.u32 %v1153, 4294901760
    %1734 = vmatpush1.msra.mxu0 %v1733
    %1735 = vmatprep.subr.mxu0 0.0
    %v1736 = vand.u32 %v1154, 4294901760
    %1737 = vmatpush1.msra.mxu0 %v1736
    %1738 = vmatprep.subr.mxu0 0.0
    %v1739 = vand.u32 %v1155, 4294901760
    %1740 = vmatpush1.msra.mxu0 %v1739
    %1741 = vmatprep.subr.mxu0 0.0
    %v1742 = vand.u32 %v1156, 4294901760
    %1743 = vmatpush1.msra.mxu0 %v1742
    %1744 = vmatprep.subr.mxu0 0.0
    %v1745 = vand.u32 %v1157, 4294901760
    %1746 = vmatpush1.msra.mxu0 %v1745
    %1747 = vmatprep.subr.mxu0 0.0
    %v1748 = vand.u32 %v1158, 4294901760
    %1749 = vmatpush1.msra.mxu0 %v1748
    %1750 = vmatprep.subr.mxu0 0.0
    %v1751 = vand.u32 %v1159, 4294901760
    %1752 = vmatpush1.msra.mxu0 %v1751
    %1753 = vmatprep.subr.mxu0 0.0
    %v1754 = vand.u32 %v1160, 4294901760
    %1755 = vmatpush1.msra.mxu0 %v1754
    %1756 = vmatprep.subr.mxu0 0.0
    %v1757 = vand.u32 %v1161, 4294901760
    %1758 = vmatpush1.msra.mxu0 %v1757
    %1759 = vmatprep.subr.mxu0 0.0
    %v1760 = vand.u32 %v1162, 4294901760
    %1761 = vmatpush1.msra.mxu0 %v1760
    %1762 = vmatprep.subr.mxu0 0.0
    %v1763 = vand.u32 %v1163, 4294901760
    %1764 = vmatpush1.msra.mxu0 %v1763
    %1765 = vmatprep.subr.mxu0 0.0
    %v1766 = vand.u32 %v1164, 4294901760
    %1767 = vmatpush1.msra.mxu0 %v1766
    %1768 = vmatprep.subr.mxu0 0.0
    %v1769 = vand.u32 %v1165, 4294901760
    %1770 = vmatpush1.msra.mxu0 %v1769
    %1771 = vmatprep.subr.mxu0 0.0
    %v1772 = vand.u32 %v1166, 4294901760
    %1773 = vmatpush1.msra.mxu0 %v1772
    %1774 = vmatprep.subr.mxu0 0.0
    %1775 = vmatpush1.msra.mxu0 0.0
    %1776 = vmatprep.subr.mxu0 0.0
    %1777 = vmatpush1.msra.mxu0 0.0
    %1778 = vmatprep.subr.mxu0 0.0
    %1779 = vmatpush1.msra.mxu0 0.0
    %1780 = vmatprep.subr.mxu0 0.0
    %1781 = vmatpush1.msra.mxu0 0.0
    %1782 = vmatprep.subr.mxu0 0.0
    %1783 = vmatpush1.msra.mxu0 0.0
    %1784 = vmatprep.subr.mxu0 0.0
    %1785 = vmatpush1.msra.mxu0 0.0
    %1786 = vmatprep.subr.mxu0 0.0
    %1787 = vmatpush1.msra.mxu0 0.0
    %1788 = vmatprep.subr.mxu0 0.0
    %1789 = vmatpush1.msra.mxu0 0.0
    %1790 = vmatprep.subr.mxu0 0.0
    %1791 = vmatpush1.msra.mxu0 0.0
    %1792 = vmatprep.subr.mxu0 0.0
    %1793 = vmatpush1.msra.mxu0 0.0
    %1794 = vmatprep.subr.mxu0 0.0
    %1795 = vmatpush1.msra.mxu0 0.0
    %1796 = vmatprep.subr.mxu0 0.0
    %1797 = vmatpush1.msra.mxu0 0.0
    %1798 = vmatprep.subr.mxu0 0.0
    %1799 = vmatpush1.msra.mxu0 0.0
    %1800 = vmatprep.subr.mxu0 0.0
    %1801 = vmatpush1.msra.mxu0 0.0
    %1802 = vmatprep.subr.mxu0 0.0
    %1803 = vmatpush1.msra.mxu0 0.0
    %1804 = vmatprep.subr.mxu0 0.0
    %1805 = vmatpush1.msra.mxu0 0.0
    %1806 = vmatprep.mubr.f32.mxu0 0.0
    %v1807 = vand.u32 %v1150, 4294901760
    %1808 = vmatmul.mubr.f32.gmra.mrb[0].mxu0 %v1807
    %v1809 = vpop.f32.mrb[0].mxu0
    %v1810 = vadd.f32 %v1723, %v1809
    %v1811 = vpop.f32.mrb[0].mxu0
    %1812 = vdwg.mxu0
    %vm1813 = vcmask 64512
    %1814 = vst.msk [vmem:[#allocation5] sm:$0xff] %vm1813, %v1810
    // Predicated region
    $region14: #{tpu_custom_call.1} parent=1 // pred_check
      _
    $region15: #{tpu_custom_call.1} parent=1 // pred_check_branch
      %1816 = sbr.rel (0) target = $region17
    $region16: #{tpu_custom_call.1} parent=1 // pred_region
      %s1818 = ssub.s32 128, 128
      %1819 = vsyncadd [#allocation4], %s1818
      %s1821 = sshll.u32 [#allocation5], 4
      %s1822 = int_to_ptr.vmem [resolvable:$true] %s1821
      %1824 = dma.vmem_to_hbm [thread:$0]  %s1822, 128, %s2, [#allocation4]
    $region17: #{tpu_custom_call.1} parent=1 // pred_fallthru
      _
    // Predicated region
    $region18: #{tpu_custom_call.1} parent=1 // pred_check
      _
    $region19: #{tpu_custom_call.1} parent=1 // pred_check_branch
      %1826 = sbr.rel (0) target = $region21
    $region20: #{tpu_custom_call.1} parent=1 // pred_region
      %1827 = dma.done [#allocation4], 128
    $region21: #{tpu_custom_call.1} parent=1 // pred_fallthru
      _
    %1828 = vsyncpa [#allocation3], 1
    %1829 = vsyncpa [#allocation4], 1

</llo_original>
